<compile_context>
chip_gen: v7x
topology: tpu7x:2x2x1
jax: 0.10.0
libtpu: 0.0.40
codegen_flags: <defaults>
</compile_context>

<pallas_src>
import math

import jax
import jax.numpy as jnp
import numpy as np
from jax import lax
from jax.experimental import pallas as pl
from jax.experimental.pallas import tpu as pltpu

# ----------------------------- model dimensions -----------------------------
IN_CHANNELS = 16
OUT_CHANNELS = 32          # C
HEADS = 4                  # H
HC = HEADS * OUT_CHANNELS  # 128
N_NODES = 8                # nodes per graph
BATCH = 2                  # graphs per pallas_call (grid axis)
BN_EPS = 1e-5
LEAKY_SLOPE = 0.01


def transformer_block_kernel(
    x_ref, adj_ref, wf_ref, bf_ref, wd_ref, wp_ref, vec_ref, out_ref,
):
    x = x_ref[...]                                   # [N, F_in] f32 (one graph)
    x_bf = x.astype(jnp.bfloat16)
    mask = adj_ref[...] != 0                         # [N, N] bool (adj stored as int8)

    # ---- fused Q/K/V projection: one [N,16] x [16,3*H*C] MXU matmul (scale pre-folded into Wq/bq) ----
    qkv = jnp.dot(x_bf, wf_ref[...], preferred_element_type=jnp.float32) + bf_ref[...]   # [N, 3*H*C] f32

    w_proj = wp_ref[...]                             # [H*C, C] bf16
    vec = vec_ref[...]                               # [3, C] f32: b_direct / gamma / beta
    neg_big = jnp.float32(-1e30)

    # Folded skip connection: (x Wskip + bskip) Wproj == x (Wskip Wproj) + b_direct.
    out = jnp.dot(x_bf, wd_ref[...], preferred_element_type=jnp.float32)                 # [N, C] f32

    # ---- statically-unrolled per-head attention + per-head output projection (no transposes) ----
    for h in range(HEADS):
        lo = h * OUT_CHANNELS
        qh = qkv[:, lo:lo + OUT_CHANNELS].astype(jnp.bfloat16)                    # [N, C]
        kh = qkv[:, HC + lo:HC + lo + OUT_CHANNELS].astype(jnp.bfloat16)          # [N, C]
        vh = qkv[:, 2 * HC + lo:2 * HC + lo + OUT_CHANNELS].astype(jnp.bfloat16)  # [N, C]

        # scores[i, j] = q_i . k_j  — contract last dims, no explicit transpose
        s = lax.dot_general(qh, kh, (((1,), (1,)), ((), ())),
                            preferred_element_type=jnp.float32)                   # [N, N] f32

        masked = jnp.where(mask, s, neg_big)
        row_max = jnp.max(masked, axis=-1, keepdims=True)
        e = jnp.where(mask, jnp.exp(masked - row_max), 0.0)
        denom = jnp.sum(e, axis=-1, keepdims=True)
        # nodes with no incoming edges aggregate to zero (matches scatter-softmax semantics)
        alpha = e * pl.reciprocal(jnp.where(denom > 0.0, denom, 1.0), approx=True)

        attn_h = jnp.dot(alpha.astype(jnp.bfloat16), vh,
                         preferred_element_type=jnp.float32)                      # [N, C]
        # per-head slice of the output projection, accumulated (no head re-concat)
        out = out + jnp.dot(attn_h.astype(jnp.bfloat16),
                            w_proj[lo:lo + OUT_CHANNELS, :],
                            preferred_element_type=jnp.float32)

    out = out + vec[0:1, :]                          # b_direct = bskip @ Wproj + bproj

    # ---- BatchNorm1d (training-mode batch stats over this graph's nodes, biased var) — f32 path ----
    mean = jnp.mean(out, axis=0, keepdims=True)
    centered = out - mean
    var = jnp.mean(centered * centered, axis=0, keepdims=True)
    out = centered * lax.rsqrt(var + BN_EPS)
    out = out * vec[1:2, :] + vec[2:3, :]            # gamma, beta

    # ---- LeakyReLU ----
    out_ref[...] = jnp.where(out > 0, out, LEAKY_SLOPE * out)


def transformer_block(x, adj, params):
    """x: [B*N, F_in] f32, adj: [B, N, N] int8 (adj[b,i,j]=1 iff edge j->i)."""
    num_graphs = adj.shape[0]
    n_total = x.shape[0]
    scale = 1.0 / math.sqrt(OUT_CHANNELS)

    # ---- host-side packing / algebraic folding ----
    w_fused = jnp.concatenate(
        [params["wq"] * scale, params["wk"], params["wv"]], axis=1
    ).astype(jnp.bfloat16)                                             # [F_in, 3*H*C] bf16
    b_fused = jnp.concatenate(
        [params["bq"] * scale, params["bk"], params["bv"]], axis=1
    )                                                                  # [1, 3*H*C] f32
    w_proj = params["wproj"].astype(jnp.bfloat16)                      # [H*C, C] bf16
    w_dir = (params["wskip"] @ params["wproj"]).astype(jnp.bfloat16)   # [F_in, C] bf16 (skip folded)
    b_dir = params["bskip"] @ params["wproj"] + params["bproj"]        # [1, C] f32
    vec = jnp.concatenate([b_dir, params["gamma"], params["beta"]], axis=0)   # [3, C] f32

    n = N_NODES
    flops = num_graphs * (
        2 * n * IN_CHANNELS * 3 * HC                              # fused QKV projection
        + HEADS * (2 * n * n * OUT_CHANNELS                       # QK^T
                   + 2 * n * n * OUT_CHANNELS                     # alpha @ V
                   + 2 * n * OUT_CHANNELS * OUT_CHANNELS)         # per-head output projection
        + 2 * n * IN_CHANNELS * OUT_CHANNELS)                     # folded skip
    bytes_accessed = (x.size * 4 + adj.size * 1 + w_fused.size * 2 + b_fused.size * 4
                      + w_dir.size * 2 + w_proj.size * 2 + vec.size * 4
                      + n_total * OUT_CHANNELS * 4)
    cost = pl.CostEstimate(flops=flops,
                           transcendentals=num_graphs * HEADS * (n * n + n),
                           bytes_accessed=bytes_accessed)

    return pl.pallas_call(
        transformer_block_kernel,
        out_shape=jax.ShapeDtypeStruct((n_total, OUT_CHANNELS), jnp.float32),
        grid=(num_graphs,),
        in_specs=[
            pl.BlockSpec((N_NODES, IN_CHANNELS), lambda b: (b, 0)),          # x      (per graph)
            pl.BlockSpec((None, N_NODES, N_NODES), lambda b: (b, 0, 0)),     # adj    (per graph, int8)
            pl.BlockSpec((IN_CHANNELS, 3 * HC), lambda b: (0, 0)),           # w_fused (pinned)
            pl.BlockSpec((1, 3 * HC), lambda b: (0, 0)),                     # b_fused (pinned)
            pl.BlockSpec((IN_CHANNELS, OUT_CHANNELS), lambda b: (0, 0)),     # w_dir   (pinned)
            pl.BlockSpec((HC, OUT_CHANNELS), lambda b: (0, 0)),              # w_proj  (pinned)
            pl.BlockSpec((3, OUT_CHANNELS), lambda b: (0, 0)),               # vec     (pinned)
        ],
        out_specs=pl.BlockSpec((N_NODES, OUT_CHANNELS), lambda b: (b, 0)),   # contiguous [B*N, C] slab
        compiler_params=pltpu.CompilerParams(dimension_semantics=("parallel",)),
        cost_estimate=cost,
    )(x, adj, w_fused, b_fused, w_dir, w_proj, vec)


def init_params(key):
    ks = jax.random.split(key, 10)

    def lin(kw, kb, fan_in, fan_out):
        bound = 1.0 / math.sqrt(fan_in)
        w = jax.random.uniform(kw, (fan_in, fan_out), jnp.float32, -bound, bound)
        b = jax.random.uniform(kb, (1, fan_out), jnp.float32, -bound, bound)
        return w, b

    wq, bq = lin(ks[0], ks[1], IN_CHANNELS, HC)
    wk, bk = lin(ks[2], ks[3], IN_CHANNELS, HC)
    wv, bv = lin(ks[4], ks[5], IN_CHANNELS, HC)
    wskip, bskip = lin(ks[6], ks[7], IN_CHANNELS, HC)
    wproj, bproj = lin(ks[8], ks[9], HC, OUT_CHANNELS)
    return dict(
        wq=wq, bq=bq, wk=wk, bk=bk, wv=wv, bv=bv,
        wskip=wskip, bskip=bskip, wproj=wproj, bproj=bproj,
        gamma=jnp.ones((1, OUT_CHANNELS), jnp.float32),
        beta=jnp.zeros((1, OUT_CHANNELS), jnp.float32),
    )


def edges_to_adj(edge_index, num_nodes):
    # adj[dst, src] = 1  (softmax groups incoming edges per target node); int8 -> 4x less DMA than f32.
    # TODO(synk): duplicate (multi-)edges collapse to one entry; PyG's scatter-softmax counts them.
    adj = np.zeros((num_nodes, num_nodes), dtype=np.int8)
    src, dst = np.asarray(edge_index)
    adj[dst, src] = 1
    return adj


if __name__ == "__main__":
    key = jax.random.PRNGKey(0)
    kx, kp = jax.random.split(key)

    # B=2 graphs, N=8 nodes each, stacked node features [B*N, F_in]
    x = jax.random.normal(kx, (BATCH * N_NODES, IN_CHANNELS), jnp.float32)

    # deterministic per-graph edge lists [2, E]: node i of graph b receives edges
    # from (i-1-b) % N and (i+2+b) % N
    adj_list = []
    for b in range(BATCH):
        dst = np.repeat(np.arange(N_NODES), 2)
        src = np.concatenate(
            [[(i - 1 - b) % N_NODES, (i + 2 + b) % N_NODES] for i in range(N_NODES)]
        )
        edge_index = np.stack([src, dst], axis=0).astype(np.int32)   # [2, 16]
        adj_list.append(edges_to_adj(edge_index, N_NODES))
    adj = jnp.asarray(np.stack(adj_list, axis=0))                    # [B, N, N] int8

    params = init_params(kp)

    out = transformer_block(x, adj, params)
    out = jax.block_until_ready(out)
    assert out.shape == (BATCH * N_NODES, OUT_CHANNELS)
    assert bool(jnp.all(jnp.isfinite(out)))
    print("KERNEL_OK")
</pallas_src>

<mosaic_0001>
module attributes {stable_mosaic.version = 11 : i64} {
  func.func @transformer_block_kernel(%arg0: i32, %arg1: memref<8x16xf32, #tpu.memory_space<vmem>>, %arg2: memref<1x8x8xi8, #tpu.memory_space<vmem>>, %arg3: memref<16x384xbf16, #tpu.memory_space<vmem>>, %arg4: memref<1x384xf32, #tpu.memory_space<vmem>>, %arg5: memref<16x32xbf16, #tpu.memory_space<vmem>>, %arg6: memref<128x32xbf16, #tpu.memory_space<vmem>>, %arg7: memref<3x32xf32, #tpu.memory_space<vmem>>, %arg8: memref<8x32xf32, #tpu.memory_space<vmem>>) attributes {dimension_semantics = [#tpu.dimension_semantics<parallel>], iteration_bounds = array<i64: 2>, scalar_prefetch = 0 : i64, scratch_operands = 0 : i64, tpu.core_type = #tpu.core_type<tc>, window_params = [{transform_indices = @transform_0, window_bounds = array<i64: 8, 16>}, {transform_indices = @transform_1, window_bounds = array<i64: 1, 8, 8>}, {pipeline_mode = #tpu.pipeline_mode<synchronous>, transform_indices = @transform_2, window_bounds = array<i64: 16, 384>}, {pipeline_mode = #tpu.pipeline_mode<synchronous>, transform_indices = @transform_3, window_bounds = array<i64: 1, 384>}, {pipeline_mode = #tpu.pipeline_mode<synchronous>, transform_indices = @transform_4, window_bounds = array<i64: 16, 32>}, {pipeline_mode = #tpu.pipeline_mode<synchronous>, transform_indices = @transform_5, window_bounds = array<i64: 128, 32>}, {pipeline_mode = #tpu.pipeline_mode<synchronous>, transform_indices = @transform_6, window_bounds = array<i64: 3, 32>}, {transform_indices = @transform_7, window_bounds = array<i64: 8, 32>}]} {
    %c0 = arith.constant 0 : index
    %c0_0 = arith.constant 0 : index
    %0 = vector.load %arg1[%c0, %c0_0] : memref<8x16xf32, #tpu.memory_space<vmem>>, vector<8x16xf32>
    %1 = arith.truncf %0 : vector<8x16xf32> to vector<8x16xbf16>
    %c0_1 = arith.constant 0 : index
    %c0_2 = arith.constant 0 : index
    %c0_3 = arith.constant 0 : index
    %2 = vector.load %arg2[%c0_1, %c0_2, %c0_3] : memref<1x8x8xi8, #tpu.memory_space<vmem>>, vector<1x8x8xi8>
    %3 = vector.shape_cast %2 : vector<1x8x8xi8> to vector<8x8xi8>
    %c0_i8 = arith.constant 0 : i8
    %4 = vector.broadcast %c0_i8 : i8 to vector<8x8xi8>
    %5 = arith.cmpi ne, %3, %4 : vector<8x8xi8>
    %c0_4 = arith.constant 0 : index
    %c0_5 = arith.constant 0 : index
    %6 = vector.load %arg3[%c0_4, %c0_5] : memref<16x384xbf16, #tpu.memory_space<vmem>>, vector<16x384xbf16>
    %cst = arith.constant dense<0.000000e+00> : vector<8x384xf32>
    %7 = tpu.matmul %1, %6, %cst {dimension_numbers = #tpu.dot_dimension_numbers<[1], [0], [0], [1], [0, 0, 1, 1], [], []>} : vector<8x16xbf16>, vector<16x384xbf16>, vector<8x384xf32> -> vector<8x384xf32>
    %c0_6 = arith.constant 0 : index
    %c0_7 = arith.constant 0 : index
    %8 = vector.load %arg4[%c0_6, %c0_7] : memref<1x384xf32, #tpu.memory_space<vmem>>, vector<1x384xf32>
    %9 = vector.broadcast %8 : vector<1x384xf32> to vector<8x384xf32>
    %10 = arith.addf %7, %9 : vector<8x384xf32>
    %c0_8 = arith.constant 0 : index
    %c0_9 = arith.constant 0 : index
    %11 = vector.load %arg6[%c0_8, %c0_9] : memref<128x32xbf16, #tpu.memory_space<vmem>>, vector<128x32xbf16>
    %c0_10 = arith.constant 0 : index
    %c0_11 = arith.constant 0 : index
    %12 = vector.load %arg7[%c0_10, %c0_11] : memref<3x32xf32, #tpu.memory_space<vmem>>, vector<3x32xf32>
    %c0_12 = arith.constant 0 : index
    %c0_13 = arith.constant 0 : index
    %13 = vector.load %arg5[%c0_12, %c0_13] : memref<16x32xbf16, #tpu.memory_space<vmem>>, vector<16x32xbf16>
    %cst_14 = arith.constant dense<0.000000e+00> : vector<8x32xf32>
    %14 = tpu.matmul %1, %13, %cst_14 {dimension_numbers = #tpu.dot_dimension_numbers<[1], [0], [0], [1], [0, 0, 1, 1], [], []>} : vector<8x16xbf16>, vector<16x32xbf16>, vector<8x32xf32> -> vector<8x32xf32>
    %15 = vector.extract_strided_slice %10 {offsets = [0, 0], sizes = [8, 32], strides = [1, 1]} : vector<8x384xf32> to vector<8x32xf32>
    %16 = arith.truncf %15 : vector<8x32xf32> to vector<8x32xbf16>
    %17 = vector.extract_strided_slice %10 {offsets = [0, 128], sizes = [8, 32], strides = [1, 1]} : vector<8x384xf32> to vector<8x32xf32>
    %18 = arith.truncf %17 : vector<8x32xf32> to vector<8x32xbf16>
    %19 = vector.extract_strided_slice %10 {offsets = [0, 256], sizes = [8, 32], strides = [1, 1]} : vector<8x384xf32> to vector<8x32xf32>
    %20 = arith.truncf %19 : vector<8x32xf32> to vector<8x32xbf16>
    %cst_15 = arith.constant dense<0.000000e+00> : vector<8x8xf32>
    %21 = tpu.matmul %16, %18, %cst_15 {dimension_numbers = #tpu.dot_dimension_numbers<[1], [1], [0], [0], [0, 0, 1, 0], [], []>} : vector<8x32xbf16>, vector<8x32xbf16>, vector<8x8xf32> -> vector<8x8xf32>
    %cst_16 = arith.constant -1.000000e+30 : f32
    %22 = vector.broadcast %cst_16 : f32 to vector<8x8xf32>
    %23 = arith.select %5, %21, %22 : vector<8x8xi1>, vector<8x8xf32>
    %cst_17 = arith.constant dense<0xFF800000> : vector<8xf32>
    %24 = vector.multi_reduction <maximumf>, %23, %cst_17 [1] : vector<8x8xf32> to vector<8xf32>
    %25 = vector.shape_cast %24 : vector<8xf32> to vector<8x1xf32>
    %26 = vector.broadcast %25 : vector<8x1xf32> to vector<8x8xf32>
    %27 = arith.subf %23, %26 : vector<8x8xf32>
    %28 = math.exp %27 : vector<8x8xf32>
    %cst_18 = arith.constant 0.000000e+00 : f32
    %29 = vector.broadcast %cst_18 : f32 to vector<8x8xf32>
    %30 = arith.select %5, %28, %29 : vector<8x8xi1>, vector<8x8xf32>
    %cst_19 = arith.constant dense<0.000000e+00> : vector<8xf32>
    %31 = vector.multi_reduction <add>, %30, %cst_19 [1] : vector<8x8xf32> to vector<8xf32>
    %32 = vector.shape_cast %31 : vector<8xf32> to vector<8x1xf32>
    %cst_20 = arith.constant 0.000000e+00 : f32
    %33 = vector.broadcast %cst_20 : f32 to vector<8x1xf32>
    %34 = arith.cmpf ogt, %32, %33 : vector<8x1xf32>
    %cst_21 = arith.constant 1.000000e+00 : f32
    %35 = vector.broadcast %cst_21 : f32 to vector<8x1xf32>
    %36 = arith.select %34, %32, %35 : vector<8x1xi1>, vector<8x1xf32>
    %37 = tpu.reciprocal %36 {approx = true} : vector<8x1xf32> -> vector<8x1xf32>
    %38 = vector.broadcast %37 : vector<8x1xf32> to vector<8x8xf32>
    %39 = arith.mulf %30, %38 : vector<8x8xf32>
    %40 = arith.truncf %39 : vector<8x8xf32> to vector<8x8xbf16>
    %cst_22 = arith.constant dense<0.000000e+00> : vector<8x32xf32>
    %41 = tpu.matmul %40, %20, %cst_22 {dimension_numbers = #tpu.dot_dimension_numbers<[1], [0], [0], [1], [0, 0, 1, 1], [], []>} : vector<8x8xbf16>, vector<8x32xbf16>, vector<8x32xf32> -> vector<8x32xf32>
    %42 = arith.truncf %41 : vector<8x32xf32> to vector<8x32xbf16>
    %43 = vector.extract_strided_slice %11 {offsets = [0, 0], sizes = [32, 32], strides = [1, 1]} : vector<128x32xbf16> to vector<32x32xbf16>
    %cst_23 = arith.constant dense<0.000000e+00> : vector<8x32xf32>
    %44 = tpu.matmul %42, %43, %cst_23 {dimension_numbers = #tpu.dot_dimension_numbers<[1], [0], [0], [1], [0, 0, 1, 1], [], []>} : vector<8x32xbf16>, vector<32x32xbf16>, vector<8x32xf32> -> vector<8x32xf32>
    %45 = arith.addf %14, %44 : vector<8x32xf32>
    %46 = vector.extract_strided_slice %10 {offsets = [0, 32], sizes = [8, 32], strides = [1, 1]} : vector<8x384xf32> to vector<8x32xf32>
    %47 = arith.truncf %46 : vector<8x32xf32> to vector<8x32xbf16>
    %48 = vector.extract_strided_slice %10 {offsets = [0, 160], sizes = [8, 32], strides = [1, 1]} : vector<8x384xf32> to vector<8x32xf32>
    %49 = arith.truncf %48 : vector<8x32xf32> to vector<8x32xbf16>
    %50 = vector.extract_strided_slice %10 {offsets = [0, 288], sizes = [8, 32], strides = [1, 1]} : vector<8x384xf32> to vector<8x32xf32>
    %51 = arith.truncf %50 : vector<8x32xf32> to vector<8x32xbf16>
    %cst_24 = arith.constant dense<0.000000e+00> : vector<8x8xf32>
    %52 = tpu.matmul %47, %49, %cst_24 {dimension_numbers = #tpu.dot_dimension_numbers<[1], [1], [0], [0], [0, 0, 1, 0], [], []>} : vector<8x32xbf16>, vector<8x32xbf16>, vector<8x8xf32> -> vector<8x8xf32>
    %cst_25 = arith.constant -1.000000e+30 : f32
    %53 = vector.broadcast %cst_25 : f32 to vector<8x8xf32>
    %54 = arith.select %5, %52, %53 : vector<8x8xi1>, vector<8x8xf32>
    %cst_26 = arith.constant dense<0xFF800000> : vector<8xf32>
    %55 = vector.multi_reduction <maximumf>, %54, %cst_26 [1] : vector<8x8xf32> to vector<8xf32>
    %56 = vector.shape_cast %55 : vector<8xf32> to vector<8x1xf32>
    %57 = vector.broadcast %56 : vector<8x1xf32> to vector<8x8xf32>
    %58 = arith.subf %54, %57 : vector<8x8xf32>
    %59 = math.exp %58 : vector<8x8xf32>
    %cst_27 = arith.constant 0.000000e+00 : f32
    %60 = vector.broadcast %cst_27 : f32 to vector<8x8xf32>
    %61 = arith.select %5, %59, %60 : vector<8x8xi1>, vector<8x8xf32>
    %cst_28 = arith.constant dense<0.000000e+00> : vector<8xf32>
    %62 = vector.multi_reduction <add>, %61, %cst_28 [1] : vector<8x8xf32> to vector<8xf32>
    %63 = vector.shape_cast %62 : vector<8xf32> to vector<8x1xf32>
    %cst_29 = arith.constant 0.000000e+00 : f32
    %64 = vector.broadcast %cst_29 : f32 to vector<8x1xf32>
    %65 = arith.cmpf ogt, %63, %64 : vector<8x1xf32>
    %cst_30 = arith.constant 1.000000e+00 : f32
    %66 = vector.broadcast %cst_30 : f32 to vector<8x1xf32>
    %67 = arith.select %65, %63, %66 : vector<8x1xi1>, vector<8x1xf32>
    %68 = tpu.reciprocal %67 {approx = true} : vector<8x1xf32> -> vector<8x1xf32>
    %69 = vector.broadcast %68 : vector<8x1xf32> to vector<8x8xf32>
    %70 = arith.mulf %61, %69 : vector<8x8xf32>
    %71 = arith.truncf %70 : vector<8x8xf32> to vector<8x8xbf16>
    %cst_31 = arith.constant dense<0.000000e+00> : vector<8x32xf32>
    %72 = tpu.matmul %71, %51, %cst_31 {dimension_numbers = #tpu.dot_dimension_numbers<[1], [0], [0], [1], [0, 0, 1, 1], [], []>} : vector<8x8xbf16>, vector<8x32xbf16>, vector<8x32xf32> -> vector<8x32xf32>
    %73 = arith.truncf %72 : vector<8x32xf32> to vector<8x32xbf16>
    %74 = vector.extract_strided_slice %11 {offsets = [32, 0], sizes = [32, 32], strides = [1, 1]} : vector<128x32xbf16> to vector<32x32xbf16>
    %cst_32 = arith.constant dense<0.000000e+00> : vector<8x32xf32>
    %75 = tpu.matmul %73, %74, %cst_32 {dimension_numbers = #tpu.dot_dimension_numbers<[1], [0], [0], [1], [0, 0, 1, 1], [], []>} : vector<8x32xbf16>, vector<32x32xbf16>, vector<8x32xf32> -> vector<8x32xf32>
    %76 = arith.addf %45, %75 : vector<8x32xf32>
    %77 = vector.extract_strided_slice %10 {offsets = [0, 64], sizes = [8, 32], strides = [1, 1]} : vector<8x384xf32> to vector<8x32xf32>
    %78 = arith.truncf %77 : vector<8x32xf32> to vector<8x32xbf16>
    %79 = vector.extract_strided_slice %10 {offsets = [0, 192], sizes = [8, 32], strides = [1, 1]} : vector<8x384xf32> to vector<8x32xf32>
    %80 = arith.truncf %79 : vector<8x32xf32> to vector<8x32xbf16>
    %81 = vector.extract_strided_slice %10 {offsets = [0, 320], sizes = [8, 32], strides = [1, 1]} : vector<8x384xf32> to vector<8x32xf32>
    %82 = arith.truncf %81 : vector<8x32xf32> to vector<8x32xbf16>
    %cst_33 = arith.constant dense<0.000000e+00> : vector<8x8xf32>
    %83 = tpu.matmul %78, %80, %cst_33 {dimension_numbers = #tpu.dot_dimension_numbers<[1], [1], [0], [0], [0, 0, 1, 0], [], []>} : vector<8x32xbf16>, vector<8x32xbf16>, vector<8x8xf32> -> vector<8x8xf32>
    %cst_34 = arith.constant -1.000000e+30 : f32
    %84 = vector.broadcast %cst_34 : f32 to vector<8x8xf32>
    %85 = arith.select %5, %83, %84 : vector<8x8xi1>, vector<8x8xf32>
    %cst_35 = arith.constant dense<0xFF800000> : vector<8xf32>
    %86 = vector.multi_reduction <maximumf>, %85, %cst_35 [1] : vector<8x8xf32> to vector<8xf32>
    %87 = vector.shape_cast %86 : vector<8xf32> to vector<8x1xf32>
    %88 = vector.broadcast %87 : vector<8x1xf32> to vector<8x8xf32>
    %89 = arith.subf %85, %88 : vector<8x8xf32>
    %90 = math.exp %89 : vector<8x8xf32>
    %cst_36 = arith.constant 0.000000e+00 : f32
    %91 = vector.broadcast %cst_36 : f32 to vector<8x8xf32>
    %92 = arith.select %5, %90, %91 : vector<8x8xi1>, vector<8x8xf32>
    %cst_37 = arith.constant dense<0.000000e+00> : vector<8xf32>
    %93 = vector.multi_reduction <add>, %92, %cst_37 [1] : vector<8x8xf32> to vector<8xf32>
    %94 = vector.shape_cast %93 : vector<8xf32> to vector<8x1xf32>
    %cst_38 = arith.constant 0.000000e+00 : f32
    %95 = vector.broadcast %cst_38 : f32 to vector<8x1xf32>
    %96 = arith.cmpf ogt, %94, %95 : vector<8x1xf32>
    %cst_39 = arith.constant 1.000000e+00 : f32
    %97 = vector.broadcast %cst_39 : f32 to vector<8x1xf32>
    %98 = arith.select %96, %94, %97 : vector<8x1xi1>, vector<8x1xf32>
    %99 = tpu.reciprocal %98 {approx = true} : vector<8x1xf32> -> vector<8x1xf32>
    %100 = vector.broadcast %99 : vector<8x1xf32> to vector<8x8xf32>
    %101 = arith.mulf %92, %100 : vector<8x8xf32>
    %102 = arith.truncf %101 : vector<8x8xf32> to vector<8x8xbf16>
    %cst_40 = arith.constant dense<0.000000e+00> : vector<8x32xf32>
    %103 = tpu.matmul %102, %82, %cst_40 {dimension_numbers = #tpu.dot_dimension_numbers<[1], [0], [0], [1], [0, 0, 1, 1], [], []>} : vector<8x8xbf16>, vector<8x32xbf16>, vector<8x32xf32> -> vector<8x32xf32>
    %104 = arith.truncf %103 : vector<8x32xf32> to vector<8x32xbf16>
    %105 = vector.extract_strided_slice %11 {offsets = [64, 0], sizes = [32, 32], strides = [1, 1]} : vector<128x32xbf16> to vector<32x32xbf16>
    %cst_41 = arith.constant dense<0.000000e+00> : vector<8x32xf32>
    %106 = tpu.matmul %104, %105, %cst_41 {dimension_numbers = #tpu.dot_dimension_numbers<[1], [0], [0], [1], [0, 0, 1, 1], [], []>} : vector<8x32xbf16>, vector<32x32xbf16>, vector<8x32xf32> -> vector<8x32xf32>
    %107 = arith.addf %76, %106 : vector<8x32xf32>
    %108 = vector.extract_strided_slice %10 {offsets = [0, 96], sizes = [8, 32], strides = [1, 1]} : vector<8x384xf32> to vector<8x32xf32>
    %109 = arith.truncf %108 : vector<8x32xf32> to vector<8x32xbf16>
    %110 = vector.extract_strided_slice %10 {offsets = [0, 224], sizes = [8, 32], strides = [1, 1]} : vector<8x384xf32> to vector<8x32xf32>
    %111 = arith.truncf %110 : vector<8x32xf32> to vector<8x32xbf16>
    %112 = vector.extract_strided_slice %10 {offsets = [0, 352], sizes = [8, 32], strides = [1, 1]} : vector<8x384xf32> to vector<8x32xf32>
    %113 = arith.truncf %112 : vector<8x32xf32> to vector<8x32xbf16>
    %cst_42 = arith.constant dense<0.000000e+00> : vector<8x8xf32>
    %114 = tpu.matmul %109, %111, %cst_42 {dimension_numbers = #tpu.dot_dimension_numbers<[1], [1], [0], [0], [0, 0, 1, 0], [], []>} : vector<8x32xbf16>, vector<8x32xbf16>, vector<8x8xf32> -> vector<8x8xf32>
    %cst_43 = arith.constant -1.000000e+30 : f32
    %115 = vector.broadcast %cst_43 : f32 to vector<8x8xf32>
    %116 = arith.select %5, %114, %115 : vector<8x8xi1>, vector<8x8xf32>
    %cst_44 = arith.constant dense<0xFF800000> : vector<8xf32>
    %117 = vector.multi_reduction <maximumf>, %116, %cst_44 [1] : vector<8x8xf32> to vector<8xf32>
    %118 = vector.shape_cast %117 : vector<8xf32> to vector<8x1xf32>
    %119 = vector.broadcast %118 : vector<8x1xf32> to vector<8x8xf32>
    %120 = arith.subf %116, %119 : vector<8x8xf32>
    %121 = math.exp %120 : vector<8x8xf32>
    %cst_45 = arith.constant 0.000000e+00 : f32
    %122 = vector.broadcast %cst_45 : f32 to vector<8x8xf32>
    %123 = arith.select %5, %121, %122 : vector<8x8xi1>, vector<8x8xf32>
    %cst_46 = arith.constant dense<0.000000e+00> : vector<8xf32>
    %124 = vector.multi_reduction <add>, %123, %cst_46 [1] : vector<8x8xf32> to vector<8xf32>
    %125 = vector.shape_cast %124 : vector<8xf32> to vector<8x1xf32>
    %cst_47 = arith.constant 0.000000e+00 : f32
    %126 = vector.broadcast %cst_47 : f32 to vector<8x1xf32>
    %127 = arith.cmpf ogt, %125, %126 : vector<8x1xf32>
    %cst_48 = arith.constant 1.000000e+00 : f32
    %128 = vector.broadcast %cst_48 : f32 to vector<8x1xf32>
    %129 = arith.select %127, %125, %128 : vector<8x1xi1>, vector<8x1xf32>
    %130 = tpu.reciprocal %129 {approx = true} : vector<8x1xf32> -> vector<8x1xf32>
    %131 = vector.broadcast %130 : vector<8x1xf32> to vector<8x8xf32>
    %132 = arith.mulf %123, %131 : vector<8x8xf32>
    %133 = arith.truncf %132 : vector<8x8xf32> to vector<8x8xbf16>
    %cst_49 = arith.constant dense<0.000000e+00> : vector<8x32xf32>
    %134 = tpu.matmul %133, %113, %cst_49 {dimension_numbers = #tpu.dot_dimension_numbers<[1], [0], [0], [1], [0, 0, 1, 1], [], []>} : vector<8x8xbf16>, vector<8x32xbf16>, vector<8x32xf32> -> vector<8x32xf32>
    %135 = arith.truncf %134 : vector<8x32xf32> to vector<8x32xbf16>
    %136 = vector.extract_strided_slice %11 {offsets = [96, 0], sizes = [32, 32], strides = [1, 1]} : vector<128x32xbf16> to vector<32x32xbf16>
    %cst_50 = arith.constant dense<0.000000e+00> : vector<8x32xf32>
    %137 = tpu.matmul %135, %136, %cst_50 {dimension_numbers = #tpu.dot_dimension_numbers<[1], [0], [0], [1], [0, 0, 1, 1], [], []>} : vector<8x32xbf16>, vector<32x32xbf16>, vector<8x32xf32> -> vector<8x32xf32>
    %138 = arith.addf %107, %137 : vector<8x32xf32>
    %139 = vector.extract_strided_slice %12 {offsets = [0, 0], sizes = [1, 32], strides = [1, 1]} : vector<3x32xf32> to vector<1x32xf32>
    %140 = vector.broadcast %139 : vector<1x32xf32> to vector<8x32xf32>
    %141 = arith.addf %138, %140 : vector<8x32xf32>
    %cst_51 = arith.constant dense<0.000000e+00> : vector<32xf32>
    %142 = vector.multi_reduction <add>, %141, %cst_51 [0] : vector<8x32xf32> to vector<32xf32>
    %143 = vector.shape_cast %142 : vector<32xf32> to vector<1x32xf32>
    %cst_52 = arith.constant 8.000000e+00 : f32
    %144 = vector.broadcast %cst_52 : f32 to vector<1x32xf32>
    %145 = arith.divf %143, %144 : vector<1x32xf32>
    %146 = vector.broadcast %145 : vector<1x32xf32> to vector<8x32xf32>
    %147 = arith.subf %141, %146 : vector<8x32xf32>
    %148 = arith.mulf %147, %147 : vector<8x32xf32>
    %cst_53 = arith.constant dense<0.000000e+00> : vector<32xf32>
    %149 = vector.multi_reduction <add>, %148, %cst_53 [0] : vector<8x32xf32> to vector<32xf32>
    %150 = vector.shape_cast %149 : vector<32xf32> to vector<1x32xf32>
    %cst_54 = arith.constant 8.000000e+00 : f32
    %151 = vector.broadcast %cst_54 : f32 to vector<1x32xf32>
    %152 = arith.divf %150, %151 : vector<1x32xf32>
    %cst_55 = arith.constant 9.99999974E-6 : f32
    %153 = vector.broadcast %cst_55 : f32 to vector<1x32xf32>
    %154 = arith.addf %152, %153 : vector<1x32xf32>
    %155 = math.rsqrt %154 : vector<1x32xf32>
    %156 = vector.broadcast %155 : vector<1x32xf32> to vector<8x32xf32>
    %157 = arith.mulf %147, %156 : vector<8x32xf32>
    %158 = vector.extract_strided_slice %12 {offsets = [1, 0], sizes = [1, 32], strides = [1, 1]} : vector<3x32xf32> to vector<1x32xf32>
    %159 = vector.broadcast %158 : vector<1x32xf32> to vector<8x32xf32>
    %160 = arith.mulf %157, %159 : vector<8x32xf32>
    %161 = vector.extract_strided_slice %12 {offsets = [2, 0], sizes = [1, 32], strides = [1, 1]} : vector<3x32xf32> to vector<1x32xf32>
    %162 = vector.broadcast %161 : vector<1x32xf32> to vector<8x32xf32>
    %163 = arith.addf %160, %162 : vector<8x32xf32>
    %cst_56 = arith.constant 0.000000e+00 : f32
    %164 = vector.broadcast %cst_56 : f32 to vector<8x32xf32>
    %165 = arith.cmpf ogt, %163, %164 : vector<8x32xf32>
    %cst_57 = arith.constant 0.00999999977 : f32
    %166 = vector.broadcast %cst_57 : f32 to vector<8x32xf32>
    %167 = arith.mulf %166, %163 : vector<8x32xf32>
    %168 = arith.select %165, %163, %167 : vector<8x32xi1>, vector<8x32xf32>
    %c0_58 = arith.constant 0 : index
    %c0_59 = arith.constant 0 : index
    %169 = vector.load %arg8[%c0_58, %c0_59] : memref<8x32xf32, #tpu.memory_space<vmem>>, vector<8x32xf32>
    tpu.vector_store %arg8[%c0_58, %c0_59], %168 {strides = array<i32>} : memref<8x32xf32, #tpu.memory_space<vmem>>, vector<8x32xf32>,
    return
  }
  func.func @transform_0(%arg0: i32) -> (i32, i32) {
    %c0_i32 = arith.constant 0 : i32
    %c0_i32_0 = arith.constant 0 : i32
    return %arg0, %c0_i32 : i32, i32
  }
  func.func @transform_1(%arg0: i32) -> (i32, i32, i32) {
    %c0_i32 = arith.constant 0 : i32
    %c0_i32_0 = arith.constant 0 : i32
    %c0_i32_1 = arith.constant 0 : i32
    return %arg0, %c0_i32, %c0_i32_0 : i32, i32, i32
  }
  func.func @transform_2(%arg0: i32) -> (i32, i32) {
    %c0_i32 = arith.constant 0 : i32
    %c0_i32_0 = arith.constant 0 : i32
    %c0_i32_1 = arith.constant 0 : i32
    return %c0_i32, %c0_i32_0 : i32, i32
  }
  func.func @transform_3(%arg0: i32) -> (i32, i32) {
    %c0_i32 = arith.constant 0 : i32
    %c0_i32_0 = arith.constant 0 : i32
    %c0_i32_1 = arith.constant 0 : i32
    return %c0_i32, %c0_i32_0 : i32, i32
  }
  func.func @transform_4(%arg0: i32) -> (i32, i32) {
    %c0_i32 = arith.constant 0 : i32
    %c0_i32_0 = arith.constant 0 : i32
    %c0_i32_1 = arith.constant 0 : i32
    return %c0_i32, %c0_i32_0 : i32, i32
  }
  func.func @transform_5(%arg0: i32) -> (i32, i32) {
    %c0_i32 = arith.constant 0 : i32
    %c0_i32_0 = arith.constant 0 : i32
    %c0_i32_1 = arith.constant 0 : i32
    return %c0_i32, %c0_i32_0 : i32, i32
  }
  func.func @transform_6(%arg0: i32) -> (i32, i32) {
    %c0_i32 = arith.constant 0 : i32
    %c0_i32_0 = arith.constant 0 : i32
    %c0_i32_1 = arith.constant 0 : i32
    return %c0_i32, %c0_i32_0 : i32, i32
  }
  func.func @transform_7(%arg0: i32) -> (i32, i32) {
    %c0_i32 = arith.constant 0 : i32
    %c0_i32_0 = arith.constant 0 : i32
    return %arg0, %c0_i32 : i32, i32
  }
}

</mosaic_0001>

<llo_original>
// kernel: tpu_custom_call.1
$region0: #{tpu_custom_call.1}
  #allocation0 [shape = 'u32[]', space=smem, size = 0x4, offset = 0x4, fixed_abs, tag = 'smem constant byte address 0x4 - core index']
  #allocation1 [shape = 'u32[144,128]{1,0:T(1,128)}', space=vmem, size = 0x12000, scoped, tag = 'internal scratch']
  %s0 = inlined_call_operand.vmem [shape: f32[16,16], index: 0, kind: input, shape index: {}]
  %s1 = inlined_call_operand.vmem [shape: s8[2,8,8], index: 1, kind: input, shape index: {}]
  %s2 = inlined_call_operand.vmem [shape: bf16[16,384], index: 2, kind: input, shape index: {}]
  %s3 = inlined_call_operand.vmem [shape: f32[1,384], index: 3, kind: input, shape index: {}]
  %s4 = inlined_call_operand.vmem [shape: bf16[16,32], index: 4, kind: input, shape index: {}]
  %s5 = inlined_call_operand.vmem [shape: bf16[128,32], index: 5, kind: input, shape index: {}]
  %s6 = inlined_call_operand.vmem [shape: f32[3,32], index: 6, kind: input, shape index: {}]
  %s7 = inlined_call_operand.hbm [shape: f32[16,32], index: 7, kind: output, shape index: {}]
  %s8 = sld [smem:[#allocation0]]
  $region61: #{tpu_custom_call.1} parent=0
    _
  %s10 = ssub.s32 1, %s8
  %s11 = scalar_select 0, %s10, %s8
  $region1: #{tpu_custom_call.1} parent=0
    #allocation2 [shape = 'u8[8192]{0}', space=vmem, size = 0x2000, scoped, tag = 'output window, operand 0']
    #allocation3 [shape = 's32[2]{0}', space=sflag, size = 0x8, scoped, tag = 'scoped memory for tpu_custom_call.1']
    %12 = vsyncpa [#allocation3], 0
    %s13 = scalar_lea.sflag [#allocation3], 1
    %14 = vsyncpa %s13, 0
    loop: start=0, step=1, limit=4
    $region2: #{tpu_custom_call.1} parent=1 // loop_pre_header
      _
    $region3: #{tpu_custom_call.1} parent=1 // loop_header
      %s16 = sphi 0, %s20
      %p17 = scmp.ge.s32.totalorder %s16, 4
      %s26 = sphi 0, %s28
      %s29 = sphi 0, %s26
      %s30 = sphi 0, %s29
      %s46 = sphi 0, %s30
      %s52 = sphi 0, %s54
      %s55 = sphi 0, %s52
      %s56 = sphi 0, %s55
      %s72 = sphi 0, %s56
      %s76 = sphi 0, %s76
      %s78 = sphi 0, %s76
      %s79 = sphi 0, %s78
      %s93 = sphi 0, %s79
      %s97 = sphi 0, %s97
      %s99 = sphi 0, %s97
      %s100 = sphi 0, %s99
      %s114 = sphi 0, %s100
      %s118 = sphi 0, %s118
      %s120 = sphi 0, %s118
      %s121 = sphi 0, %s120
      %s135 = sphi 0, %s121
      %s139 = sphi 0, %s139
      %s141 = sphi 0, %s139
      %s142 = sphi 0, %s141
      %s156 = sphi 0, %s142
      %s160 = sphi 0, %s160
      %s162 = sphi 0, %s160
      %s163 = sphi 0, %s162
      %s177 = sphi 0, %s163
      %s183 = sphi 0, %s185
      %s186 = sphi 0, %s183
      %s187 = sphi 0, %s186
      %s203 = sphi 0, %s187
    $region4: #{tpu_custom_call.1} parent=1 // loop_header_branch
      %19 = sbr.rel (%p17) target = $region8
    $region5: #{tpu_custom_call.1} parent=1 // loop_body
      %s21 = ssub.s32 %s16, 1
      %s22 = ssub.s32 %s16, 2
      %s23 = sadd.s32 %s16, 1
      %s24 = ssub.s32 %s16, %s23
      %p25 = scmp.eq.s32.totalorder %s24, 0
      %s27 = sadd.s32 %s26, 1
      %s28 = scalar_select %p25, %s26, %s27
      %p31 = pneg %p25
      %p32 = scmp.eq.s32.totalorder %s16, 1
      %p33 = por %p31, %p32
      %p34 = scmp.ne.s32.totalorder %s26, %s29
      %p35 = scmp.eq.s32.totalorder %s16, 0
      %p36 = por %p34, %p35
      %p37 = scmp.ne.s32.totalorder %s26, %s29
      %p38 = scmp.eq.s32.totalorder %s21, 1
      %p39 = por %p37, %p38
      %p40 = scmp.ne.s32.totalorder %s29, %s30
      %p41 = scmp.eq.s32.totalorder %s21, 0
      %p42 = por %p40, %p41
      %p43 = scmp.ne.s32.totalorder %s29, %s30
      %p44 = scmp.eq.s32.totalorder %s22, 1
      %p45 = por %p43, %p44
      %p47 = scmp.ne.s32.totalorder %s30, %s46
      %p48 = scmp.eq.s32.totalorder %s22, 0
      %p49 = por %p47, %p48
      %s50 = ssub.s32 %s16, %s23
      %p51 = scmp.eq.s32.totalorder %s50, 0
      %s53 = sadd.s32 %s52, 1
      %s54 = scalar_select %p51, %s52, %s53
      %p57 = pneg %p51
      %p58 = scmp.eq.s32.totalorder %s16, 1
      %p59 = por %p57, %p58
      %p60 = scmp.ne.s32.totalorder %s52, %s55
      %p61 = scmp.eq.s32.totalorder %s16, 0
      %p62 = por %p60, %p61
      %p63 = scmp.ne.s32.totalorder %s52, %s55
      %p64 = scmp.eq.s32.totalorder %s21, 1
      %p65 = por %p63, %p64
      %p66 = scmp.ne.s32.totalorder %s55, %s56
      %p67 = scmp.eq.s32.totalorder %s21, 0
      %p68 = por %p66, %p67
      %p69 = scmp.ne.s32.totalorder %s55, %s56
      %p70 = scmp.eq.s32.totalorder %s22, 1
      %p71 = por %p69, %p70
      %p73 = scmp.ne.s32.totalorder %s56, %s72
      %p74 = scmp.eq.s32.totalorder %s22, 0
      %p75 = por %p73, %p74
      %s77 = sadd.s32 %s76, 1
      %p80 = scmp.eq.s32.totalorder %s16, 1
      %p81 = scmp.ne.s32.totalorder %s76, %s78
      %p82 = scmp.eq.s32.totalorder %s16, 0
      %p83 = por %p81, %p82
      %p84 = scmp.ne.s32.totalorder %s76, %s78
      %p85 = scmp.eq.s32.totalorder %s21, 1
      %p86 = por %p84, %p85
      %p87 = scmp.ne.s32.totalorder %s78, %s79
      %p88 = scmp.eq.s32.totalorder %s21, 0
      %p89 = por %p87, %p88
      %p90 = scmp.ne.s32.totalorder %s78, %s79
      %p91 = scmp.eq.s32.totalorder %s22, 1
      %p92 = por %p90, %p91
      %p94 = scmp.ne.s32.totalorder %s79, %s93
      %p95 = scmp.eq.s32.totalorder %s22, 0
      %p96 = por %p94, %p95
      %s98 = sadd.s32 %s97, 1
      %p101 = scmp.eq.s32.totalorder %s16, 1
      %p102 = scmp.ne.s32.totalorder %s97, %s99
      %p103 = scmp.eq.s32.totalorder %s16, 0
      %p104 = por %p102, %p103
      %p105 = scmp.ne.s32.totalorder %s97, %s99
      %p106 = scmp.eq.s32.totalorder %s21, 1
      %p107 = por %p105, %p106
      %p108 = scmp.ne.s32.totalorder %s99, %s100
      %p109 = scmp.eq.s32.totalorder %s21, 0
      %p110 = por %p108, %p109
      %p111 = scmp.ne.s32.totalorder %s99, %s100
      %p112 = scmp.eq.s32.totalorder %s22, 1
      %p113 = por %p111, %p112
      %p115 = scmp.ne.s32.totalorder %s100, %s114
      %p116 = scmp.eq.s32.totalorder %s22, 0
      %p117 = por %p115, %p116
      %s119 = sadd.s32 %s118, 1
      %p122 = scmp.eq.s32.totalorder %s16, 1
      %p123 = scmp.ne.s32.totalorder %s118, %s120
      %p124 = scmp.eq.s32.totalorder %s16, 0
      %p125 = por %p123, %p124
      %p126 = scmp.ne.s32.totalorder %s118, %s120
      %p127 = scmp.eq.s32.totalorder %s21, 1
      %p128 = por %p126, %p127
      %p129 = scmp.ne.s32.totalorder %s120, %s121
      %p130 = scmp.eq.s32.totalorder %s21, 0
      %p131 = por %p129, %p130
      %p132 = scmp.ne.s32.totalorder %s120, %s121
      %p133 = scmp.eq.s32.totalorder %s22, 1
      %p134 = por %p132, %p133
      %p136 = scmp.ne.s32.totalorder %s121, %s135
      %p137 = scmp.eq.s32.totalorder %s22, 0
      %p138 = por %p136, %p137
      %s140 = sadd.s32 %s139, 1
      %p143 = scmp.eq.s32.totalorder %s16, 1
      %p144 = scmp.ne.s32.totalorder %s139, %s141
      %p145 = scmp.eq.s32.totalorder %s16, 0
      %p146 = por %p144, %p145
      %p147 = scmp.ne.s32.totalorder %s139, %s141
      %p148 = scmp.eq.s32.totalorder %s21, 1
      %p149 = por %p147, %p148
      %p150 = scmp.ne.s32.totalorder %s141, %s142
      %p151 = scmp.eq.s32.totalorder %s21, 0
      %p152 = por %p150, %p151
      %p153 = scmp.ne.s32.totalorder %s141, %s142
      %p154 = scmp.eq.s32.totalorder %s22, 1
      %p155 = por %p153, %p154
      %p157 = scmp.ne.s32.totalorder %s142, %s156
      %p158 = scmp.eq.s32.totalorder %s22, 0
      %p159 = por %p157, %p158
      %s161 = sadd.s32 %s160, 1
      %p164 = scmp.eq.s32.totalorder %s16, 1
      %p165 = scmp.ne.s32.totalorder %s160, %s162
      %p166 = scmp.eq.s32.totalorder %s16, 0
      %p167 = por %p165, %p166
      %p168 = scmp.ne.s32.totalorder %s160, %s162
      %p169 = scmp.eq.s32.totalorder %s21, 1
      %p170 = por %p168, %p169
      %p171 = scmp.ne.s32.totalorder %s162, %s163
      %p172 = scmp.eq.s32.totalorder %s21, 0
      %p173 = por %p171, %p172
      %p174 = scmp.ne.s32.totalorder %s162, %s163
      %p175 = scmp.eq.s32.totalorder %s22, 1
      %p176 = por %p174, %p175
      %p178 = scmp.ne.s32.totalorder %s163, %s177
      %p179 = scmp.eq.s32.totalorder %s22, 0
      %p180 = por %p178, %p179
      %s181 = ssub.s32 %s16, %s23
      %p182 = scmp.eq.s32.totalorder %s181, 0
      %s184 = sadd.s32 %s183, 1
      %s185 = scalar_select %p182, %s183, %s184
      %p188 = pneg %p182
      %p189 = scmp.eq.s32.totalorder %s16, 1
      %p190 = por %p188, %p189
      %p191 = scmp.ne.s32.totalorder %s183, %s186
      %p192 = scmp.eq.s32.totalorder %s16, 0
      %p193 = por %p191, %p192
      %p194 = scmp.ne.s32.totalorder %s183, %s186
      %p195 = scmp.eq.s32.totalorder %s21, 1
      %p196 = por %p194, %p195
      %p197 = scmp.ne.s32.totalorder %s186, %s187
      %p198 = scmp.eq.s32.totalorder %s21, 0
      %p199 = por %p197, %p198
      %p200 = scmp.ne.s32.totalorder %s186, %s187
      %p201 = scmp.eq.s32.totalorder %s22, 1
      %p202 = por %p200, %p201
      %p204 = scmp.ne.s32.totalorder %s187, %s203
      %p205 = scmp.eq.s32.totalorder %s22, 0
      %p206 = por %p204, %p205
      %p207 = scmp.le.s32.totalorder 1, %s16
      %p208 = scmp.lt.s32.totalorder %s16, 3
      %p209 = pnand %p207, %p208
      %p210 = pneg %p209
      // Predicated region
      $region9: #{tpu_custom_call.1} parent=5 // pred_check
        _
      $region10: #{tpu_custom_call.1} parent=5 // pred_check_branch
        %212 = sbr.rel (%p209) target = $region12
      $region11: #{tpu_custom_call.1} parent=5 // pred_region
        %s213 = ssub.s32 %s16, 1
        // Predicated region
        $region13: #{tpu_custom_call.1} parent=11 // pred_check
          %p214 = pneg %p89
        $region14: #{tpu_custom_call.1} parent=11 // pred_check_branch
          %216 = sbr.rel (%p214) target = $region16
        $region15: #{tpu_custom_call.1} parent=11 // pred_region
          _
        $region16: #{tpu_custom_call.1} parent=11 // pred_fallthru
          _
        // Predicated region
        $region17: #{tpu_custom_call.1} parent=11 // pred_check
          %p217 = pneg %p110
        $region18: #{tpu_custom_call.1} parent=11 // pred_check_branch
          %219 = sbr.rel (%p217) target = $region20
        $region19: #{tpu_custom_call.1} parent=11 // pred_region
          _
        $region20: #{tpu_custom_call.1} parent=11 // pred_fallthru
          _
        // Predicated region
        $region21: #{tpu_custom_call.1} parent=11 // pred_check
          %p220 = pneg %p131
        $region22: #{tpu_custom_call.1} parent=11 // pred_check_branch
          %222 = sbr.rel (%p220) target = $region24
        $region23: #{tpu_custom_call.1} parent=11 // pred_region
          _
        $region24: #{tpu_custom_call.1} parent=11 // pred_fallthru
          _
        // Predicated region
        $region25: #{tpu_custom_call.1} parent=11 // pred_check
          %p223 = pneg %p152
        $region26: #{tpu_custom_call.1} parent=11 // pred_check_branch
          %225 = sbr.rel (%p223) target = $region28
        $region27: #{tpu_custom_call.1} parent=11 // pred_region
          _
        $region28: #{tpu_custom_call.1} parent=11 // pred_fallthru
          _
        // Predicated region
        $region29: #{tpu_custom_call.1} parent=11 // pred_check
          %p226 = pneg %p173
        $region30: #{tpu_custom_call.1} parent=11 // pred_check_branch
          %228 = sbr.rel (%p226) target = $region32
        $region31: #{tpu_custom_call.1} parent=11 // pred_region
          _
        $region32: #{tpu_custom_call.1} parent=11 // pred_fallthru
          _
      $region12: #{tpu_custom_call.1} parent=5 // pred_fallthru
        _
      %p229 = scmp.lt.s32.totalorder %s16, 2
      // Predicated region
      $region33: #{tpu_custom_call.1} parent=5 // pred_check
        %p230 = pneg %p229
      $region34: #{tpu_custom_call.1} parent=5 // pred_check_branch
        %232 = sbr.rel (%p230) target = $region36
      $region35: #{tpu_custom_call.1} parent=5 // pred_region
        // Predicated region
        $region37: #{tpu_custom_call.1} parent=35 // pred_check
          %p233 = pneg %p36
        $region38: #{tpu_custom_call.1} parent=35 // pred_check_branch
          %235 = sbr.rel (%p233) target = $region40
        $region39: #{tpu_custom_call.1} parent=35 // pred_region
          %p236 = scmp.lt.s32.totalorder %s16, 1
          %s237 = scalar_select %p236, %s16, 1
          %s238 = smul.addr %s237, 8
          %s239 = scalar_lea.vmem %s0, %s238
        $region40: #{tpu_custom_call.1} parent=35 // pred_fallthru
          _
        // Predicated region
        $region41: #{tpu_custom_call.1} parent=35 // pred_check
          %p240 = pneg %p62
        $region42: #{tpu_custom_call.1} parent=35 // pred_check_branch
          %242 = sbr.rel (%p240) target = $region44
        $region43: #{tpu_custom_call.1} parent=35 // pred_region
          %p243 = scmp.lt.s32.totalorder %s16, 1
          %s244 = scalar_select %p243, %s16, 1
          %s245 = smul.addr %s244, 2
          %s246 = scalar_lea.vmem %s1, %s245
        $region44: #{tpu_custom_call.1} parent=35 // pred_fallthru
          _
      $region36: #{tpu_custom_call.1} parent=5 // pred_fallthru
        _
      %p247 = scmp.le.s32.totalorder 1, %s16
      %p248 = scmp.lt.s32.totalorder %s16, 3
      %p249 = pnand %p247, %p248
      %p250 = pneg %p249
      // Predicated region
      $region45: #{tpu_custom_call.1} parent=5 // pred_check
        _
      $region46: #{tpu_custom_call.1} parent=5 // pred_check_branch
        %252 = sbr.rel (%p249) target = $region48
      $region47: #{tpu_custom_call.1} parent=5 // pred_region
        %s253 = ssub.s32 %s16, 1
        %p254 = scmp.lt.s32.totalorder %s21, 1
        %s255 = scalar_select %p254, %s21, 1
        %s256 = smul.addr %s255, 8
        %s257 = scalar_lea.vmem %s0, %s256
        %p258 = pneg %p42
        %p259 = pneg %p39
        %p260 = scmp.lt.s32.totalorder %s21, 1
        %s261 = scalar_select %p260, %s21, 1
        %s262 = smul.addr %s261, 2
        %s263 = scalar_lea.vmem %s1, %s262
        %p264 = pneg %p68
        %p265 = pneg %p65
        %p266 = pneg %p89
        %p267 = pneg %p86
        %p268 = pneg %p110
        %p269 = pneg %p107
        %p270 = pneg %p131
        %p271 = pneg %p128
        %p272 = pneg %p152
        %p273 = pneg %p149
        %p274 = pneg %p173
        %p275 = pneg %p170
        %p276 = pneg %p199
        %p277 = pneg %p196
        %s278 = sand.u32 %s186, 1
        %s279 = scalar_lea.sflag [#allocation3], %s278
        %s280 = sand.u32 %s186, 1
        %s281 = smul.addr %s280, 8
        %s282 = scalar_lea.vmem [#allocation2], %s281
        %p283 = scmp.lt.s32.totalorder %s21, 1
        %s284 = scalar_select %p283, %s21, 1
        %s285 = smul.addr %s284, 8
        %s286 = scalar_lea.vmem %s0, %s285
        %p287 = scmp.lt.s32.totalorder %s21, 1
        %s288 = scalar_select %p287, %s21, 1
        %s289 = smul.addr %s288, 2
        %s290 = scalar_lea.vmem %s1, %s289
        %v294 = vld [vmem:[%s286] sm:$0xff]
        %v295 = vpack.c.bf16 %v294, %v294
        %v296 = vld [vmem:[%s290] sm:$0x3]
        %vm297 = vnez %v296
        %v298 = vld [vmem:[%s2] sm:$0xff]
        %v299 = vld [vmem:[%s2 + $0x8] sm:$0xf]
        %v300 = vld [vmem:[%s2 + $0xc] sm:$0xff]
        %v301 = vld [vmem:[%s2 + $0x14] sm:$0xf]
        %v302 = vld [vmem:[%s3] sm:$0x7]
        %v304 = vlaneseq
        %v305 = vshrl.u32 %v304, 7
        %v306 = vsub.s32 0, %v305
        %v307 = vrot.slane %v302, %v306
        %v308 = vlaneseq
        %v309 = vshrl.u32 %v308, 7
        %v310 = vsub.s32 1, %v309
        %v311 = vrot.slane %v302, %v310
        %v312 = vlaneseq
        %v313 = vshrl.u32 %v312, 7
        %v314 = vsub.s32 2, %v313
        %v315 = vrot.slane %v302, %v314
        %v323 = vunpack.c.l.b16 %v298
        %v324 = vunpack.c.h.b16 %v298
        %v325 = vunpack.c.l.b16 %v299
        %v326 = vunpack.c.l.b16 %v300
        %v327 = vunpack.c.h.b16 %v300
        %v328 = vunpack.c.l.b16 %v301
        %v329 = vpack.c.b16 %v326, %v323
        %v330 = vpack.c.b16 %v327, %v324
        %v331 = vpack.c.b16 %v328, %v325
        %vm335 = vcmask 130048
        %v337 = vsel %vm335, %v295, 0
        %339 = vmatprep.subr.bf16.mxu0 %v330
        %340 = vmatpush1.bf16.msra.mxu0 %v329
        %341 = vmatprep.subr.bf16.mxu0 0
        %342 = vmatpush1.bf16.msra.mxu0 0
        %343 = vmatprep.subr.bf16.mxu0 0
        %344 = vmatpush1.bf16.msra.mxu0 0
        %345 = vmatprep.subr.bf16.mxu0 0
        %346 = vmatpush1.bf16.msra.mxu0 0
        %347 = vmatprep.subr.bf16.mxu0 0
        %348 = vmatpush1.bf16.msra.mxu0 0
        %349 = vmatprep.subr.bf16.mxu0 0
        %350 = vmatpush1.bf16.msra.mxu0 0
        %351 = vmatprep.subr.bf16.mxu0 0
        %352 = vmatpush1.bf16.msra.mxu0 0
        %353 = vmatprep.subr.bf16.mxu0 0
        %354 = vmatpush1.bf16.msra.mxu0 0
        %355 = vmatprep.subr.bf16.mxu0 0
        %356 = vmatpush1.bf16.msra.mxu0 0
        %357 = vmatprep.subr.bf16.mxu0 0
        %358 = vmatpush1.bf16.msra.mxu0 0
        %359 = vmatprep.subr.bf16.mxu0 0
        %360 = vmatpush1.bf16.msra.mxu0 0
        %361 = vmatprep.subr.bf16.mxu0 0
        %362 = vmatpush1.bf16.msra.mxu0 0
        %363 = vmatprep.subr.bf16.mxu0 0
        %364 = vmatpush1.bf16.msra.mxu0 0
        %365 = vmatprep.subr.bf16.mxu0 0
        %366 = vmatpush1.bf16.msra.mxu0 0
        %367 = vmatprep.subr.bf16.mxu0 0
        %368 = vmatpush1.bf16.msra.mxu0 0
        %369 = vmatprep.subr.bf16.mxu0 0
        %370 = vmatpush1.bf16.msra.mxu0 0
        %371 = vmatprep.mubr.bf16.mxu0 0
        %372 = vmatmul.mubr.bf16.gmra.mrb[0].mxu0 %v337
        %v373 = vpop.f32.mrb[0].mxu0
        %v374 = vadd.f32 %v307, %v373
        %v375 = vpop.f32.mrb[0].mxu0
        %v376 = vadd.f32 %v311, %v375
        %v377 = vpop.f32.mrb[0].mxu0
        %v378 = vpop.f32.mrb[0].mxu0
        %379 = vdwg.mxu0
        %380 = vmatprep.subr.bf16.mxu0 0
        %381 = vmatpush1.bf16.msra.mxu0 %v331
        %382 = vmatprep.subr.bf16.mxu0 0
        %383 = vmatpush1.bf16.msra.mxu0 0
        %384 = vmatprep.subr.bf16.mxu0 0
        %385 = vmatpush1.bf16.msra.mxu0 0
        %386 = vmatprep.subr.bf16.mxu0 0
        %387 = vmatpush1.bf16.msra.mxu0 0
        %388 = vmatprep.subr.bf16.mxu0 0
        %389 = vmatpush1.bf16.msra.mxu0 0
        %390 = vmatprep.subr.bf16.mxu0 0
        %391 = vmatpush1.bf16.msra.mxu0 0
        %392 = vmatprep.subr.bf16.mxu0 0
        %393 = vmatpush1.bf16.msra.mxu0 0
        %394 = vmatprep.subr.bf16.mxu0 0
        %395 = vmatpush1.bf16.msra.mxu0 0
        %396 = vmatprep.subr.bf16.mxu0 0
        %397 = vmatpush1.bf16.msra.mxu0 0
        %398 = vmatprep.subr.bf16.mxu0 0
        %399 = vmatpush1.bf16.msra.mxu0 0
        %400 = vmatprep.subr.bf16.mxu0 0
        %401 = vmatpush1.bf16.msra.mxu0 0
        %402 = vmatprep.subr.bf16.mxu0 0
        %403 = vmatpush1.bf16.msra.mxu0 0
        %404 = vmatprep.subr.bf16.mxu0 0
        %405 = vmatpush1.bf16.msra.mxu0 0
        %406 = vmatprep.subr.bf16.mxu0 0
        %407 = vmatpush1.bf16.msra.mxu0 0
        %408 = vmatprep.subr.bf16.mxu0 0
        %409 = vmatpush1.bf16.msra.mxu0 0
        %410 = vmatprep.subr.bf16.mxu0 0
        %411 = vmatpush1.bf16.msra.mxu0 0
        %412 = vmatprep.mubr.bf16.mxu0 0
        %413 = vmatmul.mubr.bf16.gmra.mrb[0].mxu0 %v337
        %v414 = vpop.f32.mrb[0].mxu0
        %v415 = vadd.f32 %v315, %v414
        %v416 = vpop.f32.mrb[0].mxu0
        %v417 = vpop.f32.mrb[0].mxu0
        %v418 = vpop.f32.mrb[0].mxu0
        %419 = vdwg.mxu0
        %v420 = vld [vmem:[%s5] sm:$0xf]
        %v421 = vld [vmem:[%s5 + $0x4] sm:$0xf]
        %v422 = vld [vmem:[%s5 + $0x8] sm:$0xf]
        %v423 = vld [vmem:[%s5 + $0xc] sm:$0xf]
        %v424 = vld [vmem:[%s5 + $0x10] sm:$0xf]
        %v425 = vld [vmem:[%s5 + $0x14] sm:$0xf]
        %v426 = vld [vmem:[%s5 + $0x18] sm:$0xf]
        %v427 = vld [vmem:[%s5 + $0x1c] sm:$0xf]
        %v428 = vld [vmem:[%s5 + $0x20] sm:$0xf]
        %v429 = vld [vmem:[%s5 + $0x24] sm:$0xf]
        %v430 = vld [vmem:[%s5 + $0x28] sm:$0xf]
        %v431 = vld [vmem:[%s5 + $0x2c] sm:$0xf]
        %v432 = vld [vmem:[%s5 + $0x30] sm:$0xf]
        %v433 = vld [vmem:[%s5 + $0x34] sm:$0xf]
        %v434 = vld [vmem:[%s5 + $0x38] sm:$0xf]
        %v435 = vld [vmem:[%s5 + $0x3c] sm:$0xf]
        %v436 = vld [vmem:[%s6] sm:$0x7]
        %v437 = vld [vmem:[%s4] sm:$0xf]
        %v438 = vld [vmem:[%s4 + $0x4] sm:$0xf]
        %v439 = vpack.c.bf16 %v374, %v374
        %v440 = vpack.c.bf16 %v376, %v376
        %v441 = vpack.c.bf16 %v415, %v415
        %vm442 = vcmask 261120
        %v444 = vsel %vm442, %v439, 0
        %v447 = vsel %vm442, %v440, 0
        %449 = vmatprep.subr.bf16.mxu0 0
        %450 = vmatpush1.bf16.xpose.msra.mxu0 %v447
        %451 = vmatprep.subr.bf16.mxu0 0
        %452 = vmatpush1.bf16.xpose.msra.mxu0 0
        %453 = vmatprep.subr.bf16.mxu0 0
        %454 = vmatpush1.bf16.xpose.msra.mxu0 0
        %455 = vmatprep.subr.bf16.mxu0 0
        %456 = vmatpush1.bf16.xpose.msra.mxu0 0
        %457 = vmatprep.subr.bf16.mxu0 0
        %458 = vmatpush1.bf16.xpose.msra.mxu0 0
        %459 = vmatprep.subr.bf16.mxu0 0
        %460 = vmatpush1.bf16.xpose.msra.mxu0 0
        %461 = vmatprep.subr.bf16.mxu0 0
        %462 = vmatpush1.bf16.xpose.msra.mxu0 0
        %463 = vmatprep.subr.bf16.mxu0 0
        %464 = vmatpush1.bf16.xpose.msra.mxu0 0
        %465 = vmatprep.subr.bf16.mxu0 0
        %466 = vmatpush1.bf16.xpose.msra.mxu0 0
        %467 = vmatprep.subr.bf16.mxu0 0
        %468 = vmatpush1.bf16.xpose.msra.mxu0 0
        %469 = vmatprep.subr.bf16.mxu0 0
        %470 = vmatpush1.bf16.xpose.msra.mxu0 0
        %471 = vmatprep.subr.bf16.mxu0 0
        %472 = vmatpush1.bf16.xpose.msra.mxu0 0
        %473 = vmatprep.subr.bf16.mxu0 0
        %474 = vmatpush1.bf16.xpose.msra.mxu0 0
        %475 = vmatprep.subr.bf16.mxu0 0
        %476 = vmatpush1.bf16.xpose.msra.mxu0 0
        %477 = vmatprep.subr.bf16.mxu0 0
        %478 = vmatpush1.bf16.xpose.msra.mxu0 0
        %479 = vmatprep.subr.bf16.mxu0 0
        %480 = vmatpush1.bf16.xpose.msra.mxu0 0
        %481 = vmatprep.mubr.bf16.mxu0 0
        %482 = vmatmul.mubr.bf16.gmra.mrb[0].mxu0 %v444
        %v483 = vpop.f32.mrb[0].mxu0
        %v484 = vadd.f32 0.0, %v483
        %v485 = vpop.f32.mrb[0].mxu0
        %v486 = vpop.f32.mrb[0].mxu0
        %v487 = vpop.f32.mrb[0].mxu0
        %488 = vdwg.mxu0
        %v489 = vsel %vm297, 16843009, 0
        %v490 = vunpack.c.0.s8 %v489
        %vm491 = vcmp.ne.s32.totalorder %v490, 0
        %v492 = vsel %vm491, %v484, -1e+30
        %vm493 = vcmask 64512
        %v494 = vsel %vm493, %v492, -inf
        %495 = vmax.xlane.f32.xlu0 %v494
        %v496 = vpop.xlane.xlu0 %495
        %v497 = vsub.f32 %v492, %v496
        %v498 = vmul.f32 %v497, 1.442695
        %v499 = vpow.pop %v498
        %v500 = vsel %vm491, %v499, 0.0
        %v501 = vsel %vm493, %v500, 0.0
        %502 = vadd.xlane.f32.xlu0 %v501
        %v503 = vpop.xlane.xlu0 %502
        %vm504 = vcmp.gt.f32.partialorder %v503, 0.0
        %v505 = vsel %vm504, %v503, 1.0
        %v506 = vrcp.pop %v505
        %v507 = vmul.f32 %v500, %v506
        %v508 = vpack.c.bf16 %v507, %v507
        %v510 = vsel %vm493, %v508, 0
        %vm512 = vcmask 1043456
        %v514 = vsel %vm512, %v441, 0
        %516 = vmatprep.subr.bf16.mxu0 0
        %517 = vmatpush1.bf16.msra.mxu0 %v514
        %518 = vmatprep.subr.bf16.mxu0 0
        %519 = vmatpush1.bf16.msra.mxu0 0
        %520 = vmatprep.subr.bf16.mxu0 0
        %521 = vmatpush1.bf16.msra.mxu0 0
        %522 = vmatprep.subr.bf16.mxu0 0
        %523 = vmatpush1.bf16.msra.mxu0 0
        %524 = vmatprep.subr.bf16.mxu0 0
        %525 = vmatpush1.bf16.msra.mxu0 0
        %526 = vmatprep.subr.bf16.mxu0 0
        %527 = vmatpush1.bf16.msra.mxu0 0
        %528 = vmatprep.subr.bf16.mxu0 0
        %529 = vmatpush1.bf16.msra.mxu0 0
        %530 = vmatprep.subr.bf16.mxu0 0
        %531 = vmatpush1.bf16.msra.mxu0 0
        %532 = vmatprep.subr.bf16.mxu0 0
        %533 = vmatpush1.bf16.msra.mxu0 0
        %534 = vmatprep.subr.bf16.mxu0 0
        %535 = vmatpush1.bf16.msra.mxu0 0
        %536 = vmatprep.subr.bf16.mxu0 0
        %537 = vmatpush1.bf16.msra.mxu0 0
        %538 = vmatprep.subr.bf16.mxu0 0
        %539 = vmatpush1.bf16.msra.mxu0 0
        %540 = vmatprep.subr.bf16.mxu0 0
        %541 = vmatpush1.bf16.msra.mxu0 0
        %542 = vmatprep.subr.bf16.mxu0 0
        %543 = vmatpush1.bf16.msra.mxu0 0
        %544 = vmatprep.subr.bf16.mxu0 0
        %545 = vmatpush1.bf16.msra.mxu0 0
        %546 = vmatprep.subr.bf16.mxu0 0
        %547 = vmatpush1.bf16.msra.mxu0 0
        %548 = vmatprep.mubr.bf16.mxu0 0
        %549 = vmatmul.mubr.bf16.gmra.mrb[0].mxu0 %v510
        %v550 = vpop.f32.mrb[0].mxu0
        %v551 = vadd.f32 0.0, %v550
        %v552 = vpop.f32.mrb[0].mxu0
        %v553 = vpop.f32.mrb[0].mxu0
        %v554 = vpop.f32.mrb[0].mxu0
        %555 = vdwg.mxu0
        %v556 = vpack.c.bf16 %v551, %v551
        %v561 = vunpack.c.l.b16 %v420
        %v562 = vunpack.c.l.b16 %v421
        %v563 = vunpack.c.l.b16 %v422
        %v564 = vunpack.c.l.b16 %v423
        %v565 = vpack.c.b16 %v562, %v561
        %v566 = vpack.c.b16 %v564, %v563
        %v570 = vsel %vm442, %v556, 0
        %572 = vmatprep.subr.bf16.mxu0 0
        %573 = vmatpush1.bf16.msra.mxu0 %v565
        %574 = vmatprep.subr.bf16.mxu0 0
        %575 = vmatpush1.bf16.msra.mxu0 %v566
        %576 = vmatprep.subr.bf16.mxu0 0
        %577 = vmatpush1.bf16.msra.mxu0 0
        %578 = vmatprep.subr.bf16.mxu0 0
        %579 = vmatpush1.bf16.msra.mxu0 0
        %580 = vmatprep.subr.bf16.mxu0 0
        %581 = vmatpush1.bf16.msra.mxu0 0
        %582 = vmatprep.subr.bf16.mxu0 0
        %583 = vmatpush1.bf16.msra.mxu0 0
        %584 = vmatprep.subr.bf16.mxu0 0
        %585 = vmatpush1.bf16.msra.mxu0 0
        %586 = vmatprep.subr.bf16.mxu0 0
        %587 = vmatpush1.bf16.msra.mxu0 0
        %588 = vmatprep.subr.bf16.mxu0 0
        %589 = vmatpush1.bf16.msra.mxu0 0
        %590 = vmatprep.subr.bf16.mxu0 0
        %591 = vmatpush1.bf16.msra.mxu0 0
        %592 = vmatprep.subr.bf16.mxu0 0
        %593 = vmatpush1.bf16.msra.mxu0 0
        %594 = vmatprep.subr.bf16.mxu0 0
        %595 = vmatpush1.bf16.msra.mxu0 0
        %596 = vmatprep.subr.bf16.mxu0 0
        %597 = vmatpush1.bf16.msra.mxu0 0
        %598 = vmatprep.subr.bf16.mxu0 0
        %599 = vmatpush1.bf16.msra.mxu0 0
        %600 = vmatprep.subr.bf16.mxu0 0
        %601 = vmatpush1.bf16.msra.mxu0 0
        %602 = vmatprep.subr.bf16.mxu0 0
        %603 = vmatpush1.bf16.msra.mxu0 0
        %604 = vmatprep.mubr.bf16.mxu0 0
        %605 = vmatmul.mubr.bf16.gmra.mrb[0].mxu0 %v570
        %v606 = vpop.f32.mrb[0].mxu0
        %v607 = vadd.f32 0.0, %v606
        %v608 = vpop.f32.mrb[0].mxu0
        %v609 = vpop.f32.mrb[0].mxu0
        %v610 = vpop.f32.mrb[0].mxu0
        %611 = vdwg.mxu0
        %v614 = vunpack.c.l.b16 %v437
        %v615 = vunpack.c.l.b16 %v438
        %v616 = vpack.c.b16 %v615, %v614
        %618 = vmatprep.subr.bf16.mxu0 0
        %619 = vmatpush1.bf16.msra.mxu0 %v616
        %620 = vmatprep.subr.bf16.mxu0 0
        %621 = vmatpush1.bf16.msra.mxu0 0
        %622 = vmatprep.subr.bf16.mxu0 0
        %623 = vmatpush1.bf16.msra.mxu0 0
        %624 = vmatprep.subr.bf16.mxu0 0
        %625 = vmatpush1.bf16.msra.mxu0 0
        %626 = vmatprep.subr.bf16.mxu0 0
        %627 = vmatpush1.bf16.msra.mxu0 0
        %628 = vmatprep.subr.bf16.mxu0 0
        %629 = vmatpush1.bf16.msra.mxu0 0
        %630 = vmatprep.subr.bf16.mxu0 0
        %631 = vmatpush1.bf16.msra.mxu0 0
        %632 = vmatprep.subr.bf16.mxu0 0
        %633 = vmatpush1.bf16.msra.mxu0 0
        %634 = vmatprep.subr.bf16.mxu0 0
        %635 = vmatpush1.bf16.msra.mxu0 0
        %636 = vmatprep.subr.bf16.mxu0 0
        %637 = vmatpush1.bf16.msra.mxu0 0
        %638 = vmatprep.subr.bf16.mxu0 0
        %639 = vmatpush1.bf16.msra.mxu0 0
        %640 = vmatprep.subr.bf16.mxu0 0
        %641 = vmatpush1.bf16.msra.mxu0 0
        %642 = vmatprep.subr.bf16.mxu0 0
        %643 = vmatpush1.bf16.msra.mxu0 0
        %644 = vmatprep.subr.bf16.mxu0 0
        %645 = vmatpush1.bf16.msra.mxu0 0
        %646 = vmatprep.subr.bf16.mxu0 0
        %647 = vmatpush1.bf16.msra.mxu0 0
        %648 = vmatprep.subr.bf16.mxu0 0
        %649 = vmatpush1.bf16.msra.mxu0 0
        %650 = vmatprep.mubr.bf16.mxu0 0
        %651 = vmatmul.mubr.bf16.gmra.mrb[0].mxu0 %v337
        %v652 = vpop.f32.mrb[0].mxu0
        %v653 = vadd.f32 %v607, %v652
        %v654 = vpop.f32.mrb[0].mxu0
        %v655 = vpop.f32.mrb[0].mxu0
        %v656 = vpop.f32.mrb[0].mxu0
        %657 = vdwg.mxu0
        %659 = vrot.lane.b32.xlu0 %v439, 96
        %v660 = vpop.permute.xlu0 %659
        %662 = vrot.lane.b32.xlu0 %v440, 96
        %v663 = vpop.permute.xlu0 %662
        %v665 = vsel %vm442, %v660, 0
        %v668 = vsel %vm442, %v663, 0
        %670 = vmatprep.subr.bf16.mxu0 0
        %671 = vmatpush1.bf16.xpose.msra.mxu0 %v668
        %672 = vmatprep.subr.bf16.mxu0 0
        %673 = vmatpush1.bf16.xpose.msra.mxu0 0
        %674 = vmatprep.subr.bf16.mxu0 0
        %675 = vmatpush1.bf16.xpose.msra.mxu0 0
        %676 = vmatprep.subr.bf16.mxu0 0
        %677 = vmatpush1.bf16.xpose.msra.mxu0 0
        %678 = vmatprep.subr.bf16.mxu0 0
        %679 = vmatpush1.bf16.xpose.msra.mxu0 0
        %680 = vmatprep.subr.bf16.mxu0 0
        %681 = vmatpush1.bf16.xpose.msra.mxu0 0
        %682 = vmatprep.subr.bf16.mxu0 0
        %683 = vmatpush1.bf16.xpose.msra.mxu0 0
        %684 = vmatprep.subr.bf16.mxu0 0
        %685 = vmatpush1.bf16.xpose.msra.mxu0 0
        %686 = vmatprep.subr.bf16.mxu0 0
        %687 = vmatpush1.bf16.xpose.msra.mxu0 0
        %688 = vmatprep.subr.bf16.mxu0 0
        %689 = vmatpush1.bf16.xpose.msra.mxu0 0
        %690 = vmatprep.subr.bf16.mxu0 0
        %691 = vmatpush1.bf16.xpose.msra.mxu0 0
        %692 = vmatprep.subr.bf16.mxu0 0
        %693 = vmatpush1.bf16.xpose.msra.mxu0 0
        %694 = vmatprep.subr.bf16.mxu0 0
        %695 = vmatpush1.bf16.xpose.msra.mxu0 0
        %696 = vmatprep.subr.bf16.mxu0 0
        %697 = vmatpush1.bf16.xpose.msra.mxu0 0
        %698 = vmatprep.subr.bf16.mxu0 0
        %699 = vmatpush1.bf16.xpose.msra.mxu0 0
        %700 = vmatprep.subr.bf16.mxu0 0
        %701 = vmatpush1.bf16.xpose.msra.mxu0 0
        %702 = vmatprep.mubr.bf16.mxu0 0
        %703 = vmatmul.mubr.bf16.gmra.mrb[0].mxu0 %v665
        %v704 = vpop.f32.mrb[0].mxu0
        %v705 = vadd.f32 0.0, %v704
        %v706 = vpop.f32.mrb[0].mxu0
        %v707 = vpop.f32.mrb[0].mxu0
        %v708 = vpop.f32.mrb[0].mxu0
        %709 = vdwg.mxu0
        %v710 = vsel %vm491, %v705, -1e+30
        %v711 = vsel %vm493, %v710, -inf
        %712 = vmax.xlane.f32.xlu0 %v711
        %v713 = vpop.xlane.xlu0 %712
        %v714 = vsub.f32 %v710, %v713
        %v715 = vmul.f32 %v714, 1.442695
        %v716 = vpow.pop %v715
        %v717 = vsel %vm491, %v716, 0.0
        %v718 = vsel %vm493, %v717, 0.0
        %719 = vadd.xlane.f32.xlu0 %v718
        %v720 = vpop.xlane.xlu0 %719
        %vm721 = vcmp.gt.f32.partialorder %v720, 0.0
        %v722 = vsel %vm721, %v720, 1.0
        %v723 = vrcp.pop %v722
        %v724 = vmul.f32 %v717, %v723
        %v725 = vpack.c.bf16 %v724, %v724
        %727 = vrot.lane.b32.xlu0 %v441, 96
        %v728 = vpop.permute.xlu0 %727
        %v730 = vsel %vm493, %v725, 0
        %v733 = vsel %vm512, %v728, 0
        %735 = vmatprep.subr.bf16.mxu0 0
        %736 = vmatpush1.bf16.msra.mxu0 %v733
        %737 = vmatprep.subr.bf16.mxu0 0
        %738 = vmatpush1.bf16.msra.mxu0 0
        %739 = vmatprep.subr.bf16.mxu0 0
        %740 = vmatpush1.bf16.msra.mxu0 0
        %741 = vmatprep.subr.bf16.mxu0 0
        %742 = vmatpush1.bf16.msra.mxu0 0
        %743 = vmatprep.subr.bf16.mxu0 0
        %744 = vmatpush1.bf16.msra.mxu0 0
        %745 = vmatprep.subr.bf16.mxu0 0
        %746 = vmatpush1.bf16.msra.mxu0 0
        %747 = vmatprep.subr.bf16.mxu0 0
        %748 = vmatpush1.bf16.msra.mxu0 0
        %749 = vmatprep.subr.bf16.mxu0 0
        %750 = vmatpush1.bf16.msra.mxu0 0
        %751 = vmatprep.subr.bf16.mxu0 0
        %752 = vmatpush1.bf16.msra.mxu0 0
        %753 = vmatprep.subr.bf16.mxu0 0
        %754 = vmatpush1.bf16.msra.mxu0 0
        %755 = vmatprep.subr.bf16.mxu0 0
        %756 = vmatpush1.bf16.msra.mxu0 0
        %757 = vmatprep.subr.bf16.mxu0 0
        %758 = vmatpush1.bf16.msra.mxu0 0
        %759 = vmatprep.subr.bf16.mxu0 0
        %760 = vmatpush1.bf16.msra.mxu0 0
        %761 = vmatprep.subr.bf16.mxu0 0
        %762 = vmatpush1.bf16.msra.mxu0 0
        %763 = vmatprep.subr.bf16.mxu0 0
        %764 = vmatpush1.bf16.msra.mxu0 0
        %765 = vmatprep.subr.bf16.mxu0 0
        %766 = vmatpush1.bf16.msra.mxu0 0
        %767 = vmatprep.mubr.bf16.mxu0 0
        %768 = vmatmul.mubr.bf16.gmra.mrb[0].mxu0 %v730
        %v769 = vpop.f32.mrb[0].mxu0
        %v770 = vadd.f32 0.0, %v769
        %v771 = vpop.f32.mrb[0].mxu0
        %v772 = vpop.f32.mrb[0].mxu0
        %v773 = vpop.f32.mrb[0].mxu0
        %774 = vdwg.mxu0
        %v775 = vpack.c.bf16 %v770, %v770
        %v780 = vunpack.c.l.b16 %v424
        %v781 = vunpack.c.l.b16 %v425
        %v782 = vunpack.c.l.b16 %v426
        %v783 = vunpack.c.l.b16 %v427
        %v784 = vpack.c.b16 %v781, %v780
        %v785 = vpack.c.b16 %v783, %v782
        %v789 = vsel %vm442, %v775, 0
        %791 = vmatprep.subr.bf16.mxu0 0
        %792 = vmatpush1.bf16.msra.mxu0 %v784
        %793 = vmatprep.subr.bf16.mxu0 0
        %794 = vmatpush1.bf16.msra.mxu0 %v785
        %795 = vmatprep.subr.bf16.mxu0 0
        %796 = vmatpush1.bf16.msra.mxu0 0
        %797 = vmatprep.subr.bf16.mxu0 0
        %798 = vmatpush1.bf16.msra.mxu0 0
        %799 = vmatprep.subr.bf16.mxu0 0
        %800 = vmatpush1.bf16.msra.mxu0 0
        %801 = vmatprep.subr.bf16.mxu0 0
        %802 = vmatpush1.bf16.msra.mxu0 0
        %803 = vmatprep.subr.bf16.mxu0 0
        %804 = vmatpush1.bf16.msra.mxu0 0
        %805 = vmatprep.subr.bf16.mxu0 0
        %806 = vmatpush1.bf16.msra.mxu0 0
        %807 = vmatprep.subr.bf16.mxu0 0
        %808 = vmatpush1.bf16.msra.mxu0 0
        %809 = vmatprep.subr.bf16.mxu0 0
        %810 = vmatpush1.bf16.msra.mxu0 0
        %811 = vmatprep.subr.bf16.mxu0 0
        %812 = vmatpush1.bf16.msra.mxu0 0
        %813 = vmatprep.subr.bf16.mxu0 0
        %814 = vmatpush1.bf16.msra.mxu0 0
        %815 = vmatprep.subr.bf16.mxu0 0
        %816 = vmatpush1.bf16.msra.mxu0 0
        %817 = vmatprep.subr.bf16.mxu0 0
        %818 = vmatpush1.bf16.msra.mxu0 0
        %819 = vmatprep.subr.bf16.mxu0 0
        %820 = vmatpush1.bf16.msra.mxu0 0
        %821 = vmatprep.subr.bf16.mxu0 0
        %822 = vmatpush1.bf16.msra.mxu0 0
        %823 = vmatprep.mubr.bf16.mxu0 0
        %824 = vmatmul.mubr.bf16.gmra.mrb[0].mxu0 %v789
        %v825 = vpop.f32.mrb[0].mxu0
        %v826 = vadd.f32 0.0, %v825
        %v827 = vpop.f32.mrb[0].mxu0
        %v828 = vpop.f32.mrb[0].mxu0
        %v829 = vpop.f32.mrb[0].mxu0
        %830 = vdwg.mxu0
        %v831 = vadd.f32 %v653, %v826
        %832 = vrot.lane.b32.xlu0 %v439, 64
        %v833 = vpop.permute.xlu0 %832
        %834 = vrot.lane.b32.xlu0 %v440, 64
        %v835 = vpop.permute.xlu0 %834
        %v837 = vsel %vm442, %v833, 0
        %v840 = vsel %vm442, %v835, 0
        %842 = vmatprep.subr.bf16.mxu0 0
        %843 = vmatpush1.bf16.xpose.msra.mxu0 %v840
        %844 = vmatprep.subr.bf16.mxu0 0
        %845 = vmatpush1.bf16.xpose.msra.mxu0 0
        %846 = vmatprep.subr.bf16.mxu0 0
        %847 = vmatpush1.bf16.xpose.msra.mxu0 0
        %848 = vmatprep.subr.bf16.mxu0 0
        %849 = vmatpush1.bf16.xpose.msra.mxu0 0
        %850 = vmatprep.subr.bf16.mxu0 0
        %851 = vmatpush1.bf16.xpose.msra.mxu0 0
        %852 = vmatprep.subr.bf16.mxu0 0
        %853 = vmatpush1.bf16.xpose.msra.mxu0 0
        %854 = vmatprep.subr.bf16.mxu0 0
        %855 = vmatpush1.bf16.xpose.msra.mxu0 0
        %856 = vmatprep.subr.bf16.mxu0 0
        %857 = vmatpush1.bf16.xpose.msra.mxu0 0
        %858 = vmatprep.subr.bf16.mxu0 0
        %859 = vmatpush1.bf16.xpose.msra.mxu0 0
        %860 = vmatprep.subr.bf16.mxu0 0
        %861 = vmatpush1.bf16.xpose.msra.mxu0 0
        %862 = vmatprep.subr.bf16.mxu0 0
        %863 = vmatpush1.bf16.xpose.msra.mxu0 0
        %864 = vmatprep.subr.bf16.mxu0 0
        %865 = vmatpush1.bf16.xpose.msra.mxu0 0
        %866 = vmatprep.subr.bf16.mxu0 0
        %867 = vmatpush1.bf16.xpose.msra.mxu0 0
        %868 = vmatprep.subr.bf16.mxu0 0
        %869 = vmatpush1.bf16.xpose.msra.mxu0 0
        %870 = vmatprep.subr.bf16.mxu0 0
        %871 = vmatpush1.bf16.xpose.msra.mxu0 0
        %872 = vmatprep.subr.bf16.mxu0 0
        %873 = vmatpush1.bf16.xpose.msra.mxu0 0
        %874 = vmatprep.mubr.bf16.mxu0 0
        %875 = vmatmul.mubr.bf16.gmra.mrb[0].mxu0 %v837
        %v876 = vpop.f32.mrb[0].mxu0
        %v877 = vadd.f32 0.0, %v876
        %v878 = vpop.f32.mrb[0].mxu0
        %v879 = vpop.f32.mrb[0].mxu0
        %v880 = vpop.f32.mrb[0].mxu0
        %881 = vdwg.mxu0
        %v882 = vsel %vm491, %v877, -1e+30
        %v883 = vsel %vm493, %v882, -inf
        %884 = vmax.xlane.f32.xlu0 %v883
        %v885 = vpop.xlane.xlu0 %884
        %v886 = vsub.f32 %v882, %v885
        %v887 = vmul.f32 %v886, 1.442695
        %v888 = vpow.pop %v887
        %v889 = vsel %vm491, %v888, 0.0
        %v890 = vsel %vm493, %v889, 0.0
        %891 = vadd.xlane.f32.xlu0 %v890
        %v892 = vpop.xlane.xlu0 %891
        %vm893 = vcmp.gt.f32.partialorder %v892, 0.0
        %v894 = vsel %vm893, %v892, 1.0
        %v895 = vrcp.pop %v894
        %v896 = vmul.f32 %v889, %v895
        %v897 = vpack.c.bf16 %v896, %v896
        %898 = vrot.lane.b32.xlu0 %v441, 64
        %v899 = vpop.permute.xlu0 %898
        %v901 = vsel %vm493, %v897, 0
        %v904 = vsel %vm512, %v899, 0
        %906 = vmatprep.subr.bf16.mxu0 0
        %907 = vmatpush1.bf16.msra.mxu0 %v904
        %908 = vmatprep.subr.bf16.mxu0 0
        %909 = vmatpush1.bf16.msra.mxu0 0
        %910 = vmatprep.subr.bf16.mxu0 0
        %911 = vmatpush1.bf16.msra.mxu0 0
        %912 = vmatprep.subr.bf16.mxu0 0
        %913 = vmatpush1.bf16.msra.mxu0 0
        %914 = vmatprep.subr.bf16.mxu0 0
        %915 = vmatpush1.bf16.msra.mxu0 0
        %916 = vmatprep.subr.bf16.mxu0 0
        %917 = vmatpush1.bf16.msra.mxu0 0
        %918 = vmatprep.subr.bf16.mxu0 0
        %919 = vmatpush1.bf16.msra.mxu0 0
        %920 = vmatprep.subr.bf16.mxu0 0
        %921 = vmatpush1.bf16.msra.mxu0 0
        %922 = vmatprep.subr.bf16.mxu0 0
        %923 = vmatpush1.bf16.msra.mxu0 0
        %924 = vmatprep.subr.bf16.mxu0 0
        %925 = vmatpush1.bf16.msra.mxu0 0
        %926 = vmatprep.subr.bf16.mxu0 0
        %927 = vmatpush1.bf16.msra.mxu0 0
        %928 = vmatprep.subr.bf16.mxu0 0
        %929 = vmatpush1.bf16.msra.mxu0 0
        %930 = vmatprep.subr.bf16.mxu0 0
        %931 = vmatpush1.bf16.msra.mxu0 0
        %932 = vmatprep.subr.bf16.mxu0 0
        %933 = vmatpush1.bf16.msra.mxu0 0
        %934 = vmatprep.subr.bf16.mxu0 0
        %935 = vmatpush1.bf16.msra.mxu0 0
        %936 = vmatprep.subr.bf16.mxu0 0
        %937 = vmatpush1.bf16.msra.mxu0 0
        %938 = vmatprep.mubr.bf16.mxu0 0
        %939 = vmatmul.mubr.bf16.gmra.mrb[0].mxu0 %v901
        %v940 = vpop.f32.mrb[0].mxu0
        %v941 = vadd.f32 0.0, %v940
        %v942 = vpop.f32.mrb[0].mxu0
        %v943 = vpop.f32.mrb[0].mxu0
        %v944 = vpop.f32.mrb[0].mxu0
        %945 = vdwg.mxu0
        %v946 = vpack.c.bf16 %v941, %v941
        %v951 = vunpack.c.l.b16 %v428
        %v952 = vunpack.c.l.b16 %v429
        %v953 = vunpack.c.l.b16 %v430
        %v954 = vunpack.c.l.b16 %v431
        %v955 = vpack.c.b16 %v952, %v951
        %v956 = vpack.c.b16 %v954, %v953
        %v960 = vsel %vm442, %v946, 0
        %962 = vmatprep.subr.bf16.mxu0 0
        %963 = vmatpush1.bf16.msra.mxu0 %v955
        %964 = vmatprep.subr.bf16.mxu0 0
        %965 = vmatpush1.bf16.msra.mxu0 %v956
        %966 = vmatprep.subr.bf16.mxu0 0
        %967 = vmatpush1.bf16.msra.mxu0 0
        %968 = vmatprep.subr.bf16.mxu0 0
        %969 = vmatpush1.bf16.msra.mxu0 0
        %970 = vmatprep.subr.bf16.mxu0 0
        %971 = vmatpush1.bf16.msra.mxu0 0
        %972 = vmatprep.subr.bf16.mxu0 0
        %973 = vmatpush1.bf16.msra.mxu0 0
        %974 = vmatprep.subr.bf16.mxu0 0
        %975 = vmatpush1.bf16.msra.mxu0 0
        %976 = vmatprep.subr.bf16.mxu0 0
        %977 = vmatpush1.bf16.msra.mxu0 0
        %978 = vmatprep.subr.bf16.mxu0 0
        %979 = vmatpush1.bf16.msra.mxu0 0
        %980 = vmatprep.subr.bf16.mxu0 0
        %981 = vmatpush1.bf16.msra.mxu0 0
        %982 = vmatprep.subr.bf16.mxu0 0
        %983 = vmatpush1.bf16.msra.mxu0 0
        %984 = vmatprep.subr.bf16.mxu0 0
        %985 = vmatpush1.bf16.msra.mxu0 0
        %986 = vmatprep.subr.bf16.mxu0 0
        %987 = vmatpush1.bf16.msra.mxu0 0
        %988 = vmatprep.subr.bf16.mxu0 0
        %989 = vmatpush1.bf16.msra.mxu0 0
        %990 = vmatprep.subr.bf16.mxu0 0
        %991 = vmatpush1.bf16.msra.mxu0 0
        %992 = vmatprep.subr.bf16.mxu0 0
        %993 = vmatpush1.bf16.msra.mxu0 0
        %994 = vmatprep.mubr.bf16.mxu0 0
        %995 = vmatmul.mubr.bf16.gmra.mrb[0].mxu0 %v960
        %v996 = vpop.f32.mrb[0].mxu0
        %v997 = vadd.f32 0.0, %v996
        %v998 = vpop.f32.mrb[0].mxu0
        %v999 = vpop.f32.mrb[0].mxu0
        %v1000 = vpop.f32.mrb[0].mxu0
        %1001 = vdwg.mxu0
        %v1002 = vadd.f32 %v831, %v997
        %1003 = vrot.lane.b32.xlu0 %v439, 32
        %v1004 = vpop.permute.xlu0 %1003
        %1005 = vrot.lane.b32.xlu0 %v440, 32
        %v1006 = vpop.permute.xlu0 %1005
        %v1008 = vsel %vm442, %v1004, 0
        %v1011 = vsel %vm442, %v1006, 0
        %1013 = vmatprep.subr.bf16.mxu0 0
        %1014 = vmatpush1.bf16.xpose.msra.mxu0 %v1011
        %1015 = vmatprep.subr.bf16.mxu0 0
        %1016 = vmatpush1.bf16.xpose.msra.mxu0 0
        %1017 = vmatprep.subr.bf16.mxu0 0
        %1018 = vmatpush1.bf16.xpose.msra.mxu0 0
        %1019 = vmatprep.subr.bf16.mxu0 0
        %1020 = vmatpush1.bf16.xpose.msra.mxu0 0
        %1021 = vmatprep.subr.bf16.mxu0 0
        %1022 = vmatpush1.bf16.xpose.msra.mxu0 0
        %1023 = vmatprep.subr.bf16.mxu0 0
        %1024 = vmatpush1.bf16.xpose.msra.mxu0 0
        %1025 = vmatprep.subr.bf16.mxu0 0
        %1026 = vmatpush1.bf16.xpose.msra.mxu0 0
        %1027 = vmatprep.subr.bf16.mxu0 0
        %1028 = vmatpush1.bf16.xpose.msra.mxu0 0
        %1029 = vmatprep.subr.bf16.mxu0 0
        %1030 = vmatpush1.bf16.xpose.msra.mxu0 0
        %1031 = vmatprep.subr.bf16.mxu0 0
        %1032 = vmatpush1.bf16.xpose.msra.mxu0 0
        %1033 = vmatprep.subr.bf16.mxu0 0
        %1034 = vmatpush1.bf16.xpose.msra.mxu0 0
        %1035 = vmatprep.subr.bf16.mxu0 0
        %1036 = vmatpush1.bf16.xpose.msra.mxu0 0
        %1037 = vmatprep.subr.bf16.mxu0 0
        %1038 = vmatpush1.bf16.xpose.msra.mxu0 0
        %1039 = vmatprep.subr.bf16.mxu0 0
        %1040 = vmatpush1.bf16.xpose.msra.mxu0 0
        %1041 = vmatprep.subr.bf16.mxu0 0
        %1042 = vmatpush1.bf16.xpose.msra.mxu0 0
        %1043 = vmatprep.subr.bf16.mxu0 0
        %1044 = vmatpush1.bf16.xpose.msra.mxu0 0
        %1045 = vmatprep.mubr.bf16.mxu0 0
        %1046 = vmatmul.mubr.bf16.gmra.mrb[0].mxu0 %v1008
        %v1047 = vpop.f32.mrb[0].mxu0
        %v1048 = vadd.f32 0.0, %v1047
        %v1049 = vpop.f32.mrb[0].mxu0
        %v1050 = vpop.f32.mrb[0].mxu0
        %v1051 = vpop.f32.mrb[0].mxu0
        %1052 = vdwg.mxu0
        %v1053 = vsel %vm491, %v1048, -1e+30
        %v1054 = vsel %vm493, %v1053, -inf
        %1055 = vmax.xlane.f32.xlu0 %v1054
        %v1056 = vpop.xlane.xlu0 %1055
        %v1057 = vsub.f32 %v1053, %v1056
        %v1058 = vmul.f32 %v1057, 1.442695
        %v1059 = vpow.pop %v1058
        %v1060 = vsel %vm491, %v1059, 0.0
        %v1061 = vsel %vm493, %v1060, 0.0
        %1062 = vadd.xlane.f32.xlu0 %v1061
        %v1063 = vpop.xlane.xlu0 %1062
        %vm1064 = vcmp.gt.f32.partialorder %v1063, 0.0
        %v1065 = vsel %vm1064, %v1063, 1.0
        %v1066 = vrcp.pop %v1065
        %v1067 = vmul.f32 %v1060, %v1066
        %v1068 = vpack.c.bf16 %v1067, %v1067
        %1069 = vrot.lane.b32.xlu0 %v441, 32
        %v1070 = vpop.permute.xlu0 %1069
        %v1072 = vsel %vm493, %v1068, 0
        %v1075 = vsel %vm512, %v1070, 0
        %1077 = vmatprep.subr.bf16.mxu0 0
        %1078 = vmatpush1.bf16.msra.mxu0 %v1075
        %1079 = vmatprep.subr.bf16.mxu0 0
        %1080 = vmatpush1.bf16.msra.mxu0 0
        %1081 = vmatprep.subr.bf16.mxu0 0
        %1082 = vmatpush1.bf16.msra.mxu0 0
        %1083 = vmatprep.subr.bf16.mxu0 0
        %1084 = vmatpush1.bf16.msra.mxu0 0
        %1085 = vmatprep.subr.bf16.mxu0 0
        %1086 = vmatpush1.bf16.msra.mxu0 0
        %1087 = vmatprep.subr.bf16.mxu0 0
        %1088 = vmatpush1.bf16.msra.mxu0 0
        %1089 = vmatprep.subr.bf16.mxu0 0
        %1090 = vmatpush1.bf16.msra.mxu0 0
        %1091 = vmatprep.subr.bf16.mxu0 0
        %1092 = vmatpush1.bf16.msra.mxu0 0
        %1093 = vmatprep.subr.bf16.mxu0 0
        %1094 = vmatpush1.bf16.msra.mxu0 0
        %1095 = vmatprep.subr.bf16.mxu0 0
        %1096 = vmatpush1.bf16.msra.mxu0 0
        %1097 = vmatprep.subr.bf16.mxu0 0
        %1098 = vmatpush1.bf16.msra.mxu0 0
        %1099 = vmatprep.subr.bf16.mxu0 0
        %1100 = vmatpush1.bf16.msra.mxu0 0
        %1101 = vmatprep.subr.bf16.mxu0 0
        %1102 = vmatpush1.bf16.msra.mxu0 0
        %1103 = vmatprep.subr.bf16.mxu0 0
        %1104 = vmatpush1.bf16.msra.mxu0 0
        %1105 = vmatprep.subr.bf16.mxu0 0
        %1106 = vmatpush1.bf16.msra.mxu0 0
        %1107 = vmatprep.subr.bf16.mxu0 0
        %1108 = vmatpush1.bf16.msra.mxu0 0
        %1109 = vmatprep.mubr.bf16.mxu0 0
        %1110 = vmatmul.mubr.bf16.gmra.mrb[0].mxu0 %v1072
        %v1111 = vpop.f32.mrb[0].mxu0
        %v1112 = vadd.f32 0.0, %v1111
        %v1113 = vpop.f32.mrb[0].mxu0
        %v1114 = vpop.f32.mrb[0].mxu0
        %v1115 = vpop.f32.mrb[0].mxu0
        %1116 = vdwg.mxu0
        %v1117 = vpack.c.bf16 %v1112, %v1112
        %v1122 = vunpack.c.l.b16 %v432
        %v1123 = vunpack.c.l.b16 %v433
        %v1124 = vunpack.c.l.b16 %v434
        %v1125 = vunpack.c.l.b16 %v435
        %v1126 = vpack.c.b16 %v1123, %v1122
        %v1127 = vpack.c.b16 %v1125, %v1124
        %v1131 = vsel %vm442, %v1117, 0
        %1133 = vmatprep.subr.bf16.mxu0 0
        %1134 = vmatpush1.bf16.msra.mxu0 %v1126
        %1135 = vmatprep.subr.bf16.mxu0 0
        %1136 = vmatpush1.bf16.msra.mxu0 %v1127
        %1137 = vmatprep.subr.bf16.mxu0 0
        %1138 = vmatpush1.bf16.msra.mxu0 0
        %1139 = vmatprep.subr.bf16.mxu0 0
        %1140 = vmatpush1.bf16.msra.mxu0 0
        %1141 = vmatprep.subr.bf16.mxu0 0
        %1142 = vmatpush1.bf16.msra.mxu0 0
        %1143 = vmatprep.subr.bf16.mxu0 0
        %1144 = vmatpush1.bf16.msra.mxu0 0
        %1145 = vmatprep.subr.bf16.mxu0 0
        %1146 = vmatpush1.bf16.msra.mxu0 0
        %1147 = vmatprep.subr.bf16.mxu0 0
        %1148 = vmatpush1.bf16.msra.mxu0 0
        %1149 = vmatprep.subr.bf16.mxu0 0
        %1150 = vmatpush1.bf16.msra.mxu0 0
        %1151 = vmatprep.subr.bf16.mxu0 0
        %1152 = vmatpush1.bf16.msra.mxu0 0
        %1153 = vmatprep.subr.bf16.mxu0 0
        %1154 = vmatpush1.bf16.msra.mxu0 0
        %1155 = vmatprep.subr.bf16.mxu0 0
        %1156 = vmatpush1.bf16.msra.mxu0 0
        %1157 = vmatprep.subr.bf16.mxu0 0
        %1158 = vmatpush1.bf16.msra.mxu0 0
        %1159 = vmatprep.subr.bf16.mxu0 0
        %1160 = vmatpush1.bf16.msra.mxu0 0
        %1161 = vmatprep.subr.bf16.mxu0 0
        %1162 = vmatpush1.bf16.msra.mxu0 0
        %1163 = vmatprep.subr.bf16.mxu0 0
        %1164 = vmatpush1.bf16.msra.mxu0 0
        %1165 = vmatprep.mubr.bf16.mxu0 0
        %1166 = vmatmul.mubr.bf16.gmra.mrb[0].mxu0 %v1131
        %v1167 = vpop.f32.mrb[0].mxu0
        %v1168 = vadd.f32 0.0, %v1167
        %v1169 = vpop.f32.mrb[0].mxu0
        %v1170 = vpop.f32.mrb[0].mxu0
        %v1171 = vpop.f32.mrb[0].mxu0
        %1172 = vdwg.mxu0
        %v1173 = vadd.f32 %v1002, %v1168
        %v1174 = vlaneseq
        %v1175 = vshrl.u32 %v1174, 7
        %v1176 = vsub.s32 0, %v1175
        %v1177 = vrot.slane %v436, %v1176
        %v1178 = vadd.f32 %v1173, %v1177
        %v1179 = vsel %vm442, %v1178, 0.0
        %v1180 = vrot.slane %v1179, 4
        %v1181 = vadd.f32 %v1179, %v1180
        %v1182 = vrot.slane %v1181, 2
        %v1183 = vadd.f32 %v1181, %v1182
        %v1184 = vrot.slane %v1183, 1
        %v1185 = vadd.f32 %v1183, %v1184
        %v1186 = vrcp.pop 8.0
        %v1187 = vmul.f32 %v1185, %v1186
        %v1188 = vsub.f32 %v1178, %v1187
        %v1189 = vmul.f32 %v1188, %v1188
        %v1190 = vsel %vm442, %v1189, 0.0
        %v1191 = vrot.slane %v1190, 4
        %v1192 = vadd.f32 %v1190, %v1191
        %v1193 = vrot.slane %v1192, 2
        %v1194 = vadd.f32 %v1192, %v1193
        %v1195 = vrot.slane %v1194, 1
        %v1196 = vadd.f32 %v1194, %v1195
        %v1197 = vmul.f32 %v1196, %v1186
        %v1198 = vadd.f32 %v1197, 1e-05
        %v1199 = vrsqrt.pop %v1198
        %v1200 = vmul.f32 %v1188, %v1199
        %v1201 = vlaneseq
        %v1202 = vshrl.u32 %v1201, 7
        %v1203 = vsub.s32 1, %v1202
        %v1204 = vrot.slane %v436, %v1203
        %v1205 = vmul.f32 %v1200, %v1204
        %v1206 = vlaneseq
        %v1207 = vshrl.u32 %v1206, 7
        %v1208 = vsub.s32 2, %v1207
        %v1209 = vrot.slane %v436, %v1208
        %v1210 = vadd.f32 %v1205, %v1209
        %vm1211 = vcmp.gt.f32.partialorder %v1210, 0.0
        %v1212 = vmul.f32 %v1210, 0.01
        %v1213 = vsel %vm1211, %v1210, %v1212
        %1214 = vst.msk [vmem:[%s282] sm:$0xff] %vm442, %v1213
        %s1215 = sand.u32 %s186, 1
        %s1216 = scalar_lea.sflag [#allocation3], %s1215
        %s1217 = sand.u32 %s186, 1
        %s1218 = smul.addr %s1217, 8
        %s1219 = scalar_lea.vmem [#allocation2], %s1218
        // Predicated region
        $region49: #{tpu_custom_call.1} parent=47 // pred_check
          %p1220 = pneg %p196
        $region50: #{tpu_custom_call.1} parent=47 // pred_check_branch
          %1222 = sbr.rel (%p1220) target = $region52
        $region51: #{tpu_custom_call.1} parent=47 // pred_region
          %s1224 = ssub.s32 128, 128
          %1225 = vsyncadd %s1216, %s1224
          %s1226 = smul.addr %s21, 128
          %s1227 = scalar_lea.hbm %s7, %s1226
          %s1229 = sshll.u32 %s1219, 4
          %s1230 = int_to_ptr.vmem [resolvable:$true] %s1229
          %1232 = dma.vmem_to_hbm [thread:$0]  %s1230, 128, %s1227, %s1216
        $region52: #{tpu_custom_call.1} parent=47 // pred_fallthru
          _
      $region48: #{tpu_custom_call.1} parent=5 // pred_fallthru
        _
      %p1233 = scmp.le.s32.totalorder 2, %s16
      // Predicated region
      $region53: #{tpu_custom_call.1} parent=5 // pred_check
        %p1234 = pneg %p1233
      $region54: #{tpu_custom_call.1} parent=5 // pred_check_branch
        %1236 = sbr.rel (%p1234) target = $region56
      $region55: #{tpu_custom_call.1} parent=5 // pred_region
        %s1237 = ssub.s32 %s16, 2
        // Predicated region
        $region57: #{tpu_custom_call.1} parent=55 // pred_check
          %p1238 = pneg %p202
        $region58: #{tpu_custom_call.1} parent=55 // pred_check_branch
          %1240 = sbr.rel (%p1238) target = $region60
        $region59: #{tpu_custom_call.1} parent=55 // pred_region
          %s1241 = sand.u32 %s187, 1
          %s1242 = scalar_lea.sflag [#allocation3], %s1241
          %s1243 = sand.u32 %s187, 1
          %s1244 = smul.addr %s1243, 8
          %s1245 = scalar_lea.vmem [#allocation2], %s1244
          %1246 = dma.done %s1242, 128
        $region60: #{tpu_custom_call.1} parent=55 // pred_fallthru
          _
      $region56: #{tpu_custom_call.1} parent=5 // pred_fallthru
        _
    $region6: #{tpu_custom_call.1} parent=1 // loop_footer
      %s20 = sadd.s32 1, %s16
    $region7: #{tpu_custom_call.1} parent=1 // loop_footer_branch
      %15 = sbr.rel target = $region3
    $region8: #{tpu_custom_call.1} parent=1 // loop_exit
      _
    %1247 = vsyncpa [#allocation3], 1
    %s1248 = scalar_lea.sflag [#allocation3], 1
    %1249 = vsyncpa %s1248, 1

</llo_original>
